<compile_context>
chip_gen: v6e
topology: v6e:2x2x1
jax: 0.10.0
libtpu: 0.0.40
codegen_flags: <defaults>
</compile_context>

<pallas_src>
import jax
import jax.numpy as jnp
from jax import lax
from jax.experimental import pallas as pl
from jax.experimental.pallas import tpu as pltpu

K = 3  # conv kernel size ('same' padding = K // 2)


def residual_block_kernel(x_ref, w1_ref, b1_ref, w2_ref, b2_ref,
                          f1_ref, f2_ref, wsc_ref, bsc_ref, o_ref):
    Bblk, Cin, L = x_ref.shape
    Cout = o_ref.shape[1]
    M = Bblk * L

    # NCL tile -> row-major (sample-major, time-minor) rows: (Bblk*L, Cin).
    # Minor-dim transpose runs on the XLU; doing it here removes a full wrapper
    # HBM round trip for the layout change.
    x2 = jnp.transpose(x_ref[...], (0, 2, 1)).reshape(M, Cin).astype(jnp.float32)

    rows = lax.broadcasted_iota(jnp.int32, (M, 1), 0)
    first = (rows % L) == 0            # first time-step of each sample
    last = (rows % L) == (L - 1)       # last time-step of each sample

    def taps(v):
        # row t of result = [v[t-1], v[t], v[t+1]] with zeros at sample edges.
        # pltpu.roll matches jnp.roll; use M-1 instead of -1 for the up-shift.
        prev = jnp.where(first, 0.0, pltpu.roll(v, 1, 0))
        nxt = jnp.where(last, 0.0, pltpu.roll(v, M - 1, 0))
        return jnp.concatenate([prev, v, nxt], axis=1)

    # ---- conv1 (+ folded bn1) -> relu ; nn.Dropout(0.1) is identity in eval ----
    y = jnp.dot(taps(x2).astype(jnp.bfloat16), w1_ref[...],
                preferred_element_type=jnp.float32) + b1_ref[...]
    y = jnp.maximum(y, 0.0)

    # ---- conv2 (+ folded bn2) ----
    z = jnp.dot(taps(y).astype(jnp.bfloat16), w2_ref[...],
                preferred_element_type=jnp.float32) + b2_ref[...]

    # ---- SE: per-sample mean over L -> fc1 -> relu -> fc2 -> sigmoid gate ----
    z3 = z.reshape(Bblk, L, Cout)
    g = jnp.mean(z3, axis=1)                                   # (Bblk, Cout)
    h = jnp.maximum(jnp.dot(g, f1_ref[...],
                            preferred_element_type=jnp.float32), 0.0)
    gate = jax.nn.sigmoid(jnp.dot(h, f2_ref[...],
                                  preferred_element_type=jnp.float32))
    z3 = z3 * gate[:, None, :]

    # ---- shortcut: conv1x1 (+ folded bn) ----
    sc = jnp.dot(x2.astype(jnp.bfloat16), wsc_ref[...],
                 preferred_element_type=jnp.float32) + bsc_ref[...]

    res = jnp.maximum(z3 + sc.reshape(Bblk, L, Cout), 0.0)
    # Emit NCL directly: no post-kernel transpose and no pad-channel writeback.
    o_ref[...] = jnp.transpose(res, (0, 2, 1)).astype(o_ref.dtype)


def _fold_bn(gamma, beta, mean, var, eps=1e-5):
    s = gamma / jnp.sqrt(var + eps)
    return s, beta - mean * s


def _pick_bblk(batch, length, cin, cout, vmem_budget=16 * 1024 * 1024):
    """Samples per grid step and the (possibly padded) batch size."""
    # Target ~2048 rows per step: amortizes the ~0.35us/step pipeline overhead
    # and fills MXU rows.
    cap = max(1, min(batch, max(1, 2048 // max(length, 1))))
    # Rough VMEM bytes/sample: double-buffered in+out tiles + f32 taps and
    # activation intermediates. Keeps one code path safe for v7x (64 MiB VMEM).
    per_sample = length * ((cin + cout) * 4 * 2
                           + (3 * cin + 3 * cout + 6 * cout) * 4)
    cap = max(1, min(cap, vmem_budget // max(per_sample, 1)))
    # Prefer an exact divisor of batch (no padding) unless it costs >2x steps.
    for d in range(cap, 0, -1):
        if batch % d == 0 and 2 * d >= cap:
            return d, batch
    return cap, -(-batch // cap) * cap     # pad batch up to a multiple of cap


def residual_block(x_ncl, p):
    """x_ncl: (B, Cin, L) in PyTorch NCL layout. Returns (B, Cout, L) float32."""
    B, Cin, L = x_ncl.shape
    Cout = p['w1'].shape[0]
    Cr = p['fc1'].shape[0]

    s1, t1 = _fold_bn(*p['bn1'])
    s2, t2 = _fold_bn(*p['bn2'])
    ssc, tsc = _fold_bn(*p['bnsc'])

    # conv1: (Cout, Cin, K) -> (K*Cin, Cout), BN scale folded into the weights.
    w1 = (jnp.transpose(p['w1'], (2, 1, 0)) * s1).reshape(K * Cin, Cout)
    w1 = w1.astype(jnp.bfloat16)
    b1 = (p['b1'] * s1 + t1)[None, :].astype(jnp.float32)

    # conv2: (Cout, Cout, K) -> (K*Cout, Cout)
    w2 = (jnp.transpose(p['w2'], (2, 1, 0)) * s2).reshape(K * Cout, Cout)
    w2 = w2.astype(jnp.bfloat16)
    b2 = (p['b2'] * s2 + t2)[None, :].astype(jnp.float32)

    # shortcut conv1x1: (Cout, Cin, 1) -> (Cin, Cout)
    wsc = (p['wsc'][:, :, 0].T * ssc).astype(jnp.bfloat16)
    bsc = (p['bsc'] * ssc + tsc)[None, :].astype(jnp.float32)

    # SE weights (tiny; keep f32, bias-free exactly as in the PyTorch module).
    f1 = p['fc1'].T.astype(jnp.float32)            # (Cout, Cr)
    f2 = p['fc2'].T.astype(jnp.float32)            # (Cr, Cout)

    bblk, Bp = _pick_bblk(B, L, Cin, Cout)
    x = x_ncl.astype(jnp.float32)
    if Bp != B:
        # TODO(synk): a masked last block would avoid this pad copy for odd B.
        x = jnp.pad(x, ((0, Bp - B), (0, 0), (0, 0)))

    def full(shape):
        return pl.BlockSpec(shape, lambda b: (0,) * len(shape))

    out = pl.pallas_call(
        residual_block_kernel,
        out_shape=jax.ShapeDtypeStruct((Bp, Cout, L), jnp.float32),
        grid_spec=pltpu.PrefetchScalarGridSpec(
            num_scalar_prefetch=0,
            grid=(Bp // bblk,),
            in_specs=[
                pl.BlockSpec((bblk, Cin, L), lambda b: (b, 0, 0)),
                full((K * Cin, Cout)), full((1, Cout)),
                full((K * Cout, Cout)), full((1, Cout)),
                full((Cout, Cr)), full((Cr, Cout)),
                full((Cin, Cout)), full((1, Cout)),
            ],
            out_specs=pl.BlockSpec((bblk, Cout, L), lambda b: (b, 0, 0)),
        ),
        compiler_params=pltpu.CompilerParams(
            dimension_semantics=("parallel",),
            vmem_limit_bytes=32 * 1024 * 1024,
        ),
    )(x, w1, b1, w2, b2, f1, f2, wsc, bsc)

    return out if Bp == B else out[:B]


def reference(x, p):
    """Pure-JAX f32 reference matching PyTorch eval-mode semantics (NCL)."""
    hi = lax.Precision.HIGHEST

    def conv1d(x, w, b, pad):
        y = lax.conv_general_dilated(x, w, (1,), [(pad, pad)],
                                     dimension_numbers=('NCH', 'OIH', 'NCH'),
                                     precision=hi)
        return y + b[None, :, None]

    def bn(x, pr, eps=1e-5):
        g, b, m, v = pr
        return ((x - m[None, :, None]) / jnp.sqrt(v[None, :, None] + eps)
                * g[None, :, None] + b[None, :, None])

    out = jax.nn.relu(bn(conv1d(x, p['w1'], p['b1'], K // 2), p['bn1']))
    out = bn(conv1d(out, p['w2'], p['b2'], K // 2), p['bn2'])
    y = jnp.mean(out, axis=2)                                  # (B, C)
    y = jax.nn.relu(jnp.dot(y, p['fc1'].T, precision=hi))
    y = jax.nn.sigmoid(jnp.dot(y, p['fc2'].T, precision=hi))
    out = out * y[:, :, None]
    sc = bn(conv1d(x, p['wsc'], p['bsc'], 0), p['bnsc'])
    return jax.nn.relu(out + sc)


if __name__ == "__main__":
    B, Cin, Cout, L = 2, 16, 32, 64
    Cr = Cout // 16                                            # SE reduction=16

    key = jax.random.PRNGKey(0)
    ks = jax.random.split(key, 24)

    def bn_params(i):
        return (jax.random.uniform(ks[i], (Cout,), minval=0.5, maxval=1.5),
                jax.random.normal(ks[i + 1], (Cout,)) * 0.1,
                jax.random.normal(ks[i + 2], (Cout,)) * 0.1,
                jax.random.uniform(ks[i + 3], (Cout,), minval=0.5, maxval=1.5))

    params = {
        'w1': jax.random.normal(ks[0], (Cout, Cin, K)) * 0.1,
        'b1': jax.random.normal(ks[1], (Cout,)) * 0.1,
        'bn1': bn_params(2),
        'w2': jax.random.normal(ks[6], (Cout, Cout, K)) * 0.1,
        'b2': jax.random.normal(ks[7], (Cout,)) * 0.1,
        'bn2': bn_params(8),
        'fc1': jax.random.normal(ks[12], (Cr, Cout)) * 0.3,    # Linear(C, C//16)
        'fc2': jax.random.normal(ks[13], (Cout, Cr)) * 0.3,    # Linear(C//16, C)
        'wsc': jax.random.normal(ks[14], (Cout, Cin, 1)) * 0.1,
        'bsc': jax.random.normal(ks[15], (Cout,)) * 0.1,
        'bnsc': bn_params(16),
    }

    x = jax.random.normal(ks[20], (B, Cin, L), jnp.float32)

    out = residual_block(x, params)
    out = jax.block_until_ready(out)

    ref = reference(x, params)
    assert out.shape == (B, Cout, L)
    max_err = float(jnp.max(jnp.abs(out - ref)))
    # bf16 MXU operands vs f32 reference -> loosen tolerance accordingly.
    assert jnp.allclose(out, ref, rtol=2e-2, atol=2e-2), \
        f"max abs err {max_err}"

    print("KERNEL_OK")
</pallas_src>

<mosaic_0001>
module attributes {stable_mosaic.version = 11 : i64} {
  func.func @residual_block_kernel(%arg0: i32, %arg1: memref<2x16x64xf32, #tpu.memory_space<vmem>>, %arg2: memref<48x32xbf16, #tpu.memory_space<vmem>>, %arg3: memref<1x32xf32, #tpu.memory_space<vmem>>, %arg4: memref<96x32xbf16, #tpu.memory_space<vmem>>, %arg5: memref<1x32xf32, #tpu.memory_space<vmem>>, %arg6: memref<32x2xf32, #tpu.memory_space<vmem>>, %arg7: memref<2x32xf32, #tpu.memory_space<vmem>>, %arg8: memref<16x32xbf16, #tpu.memory_space<vmem>>, %arg9: memref<1x32xf32, #tpu.memory_space<vmem>>, %arg10: memref<2x32x64xf32, #tpu.memory_space<vmem>>) attributes {dimension_semantics = [#tpu.dimension_semantics<parallel>], iteration_bounds = array<i64: 1>, scalar_prefetch = 0 : i64, scratch_operands = 0 : i64, tpu.core_type = #tpu.core_type<tc>, window_params = [{transform_indices = @transform_0, window_bounds = array<i64: 2, 16, 64>}, {pipeline_mode = #tpu.pipeline_mode<synchronous>, transform_indices = @transform_1, window_bounds = array<i64: 48, 32>}, {pipeline_mode = #tpu.pipeline_mode<synchronous>, transform_indices = @transform_2, window_bounds = array<i64: 1, 32>}, {pipeline_mode = #tpu.pipeline_mode<synchronous>, transform_indices = @transform_3, window_bounds = array<i64: 96, 32>}, {pipeline_mode = #tpu.pipeline_mode<synchronous>, transform_indices = @transform_4, window_bounds = array<i64: 1, 32>}, {pipeline_mode = #tpu.pipeline_mode<synchronous>, transform_indices = @transform_5, window_bounds = array<i64: 32, 2>}, {pipeline_mode = #tpu.pipeline_mode<synchronous>, transform_indices = @transform_6, window_bounds = array<i64: 2, 32>}, {pipeline_mode = #tpu.pipeline_mode<synchronous>, transform_indices = @transform_7, window_bounds = array<i64: 16, 32>}, {pipeline_mode = #tpu.pipeline_mode<synchronous>, transform_indices = @transform_8, window_bounds = array<i64: 1, 32>}, {transform_indices = @transform_9, window_bounds = array<i64: 2, 32, 64>}]} {
    %c0 = arith.constant 0 : index
    %c0_0 = arith.constant 0 : index
    %c0_1 = arith.constant 0 : index
    %0 = vector.load %arg1[%c0, %c0_0, %c0_1] : memref<2x16x64xf32, #tpu.memory_space<vmem>>, vector<2x16x64xf32>
    %1 = tpu.transpose %0, [0, 2, 1] : vector<2x16x64xf32> -> vector<2x64x16xf32>
    %2 = vector.shape_cast %1 : vector<2x64x16xf32> to vector<128x16xf32>
    %3 = tpu.iota {dimensions = array<i32: 0>} : vector<128x1xi32>
    %c64_i32 = arith.constant 64 : i32
    %c0_i32 = arith.constant 0 : i32
    %4 = arith.cmpi eq, %c64_i32, %c0_i32 : i32
    %c1_i32 = arith.constant 1 : i32
    %5 = arith.select %4, %c1_i32, %c64_i32 : i32
    %6 = vector.broadcast %5 : i32 to vector<128x1xi32>
    %7 = arith.remsi %3, %6 : vector<128x1xi32>
    %c0_i32_2 = arith.constant 0 : i32
    %8 = vector.broadcast %c0_i32_2 : i32 to vector<128x1xi32>
    %9 = arith.cmpi ne, %7, %8 : vector<128x1xi32>
    %c0_i32_3 = arith.constant 0 : i32
    %10 = vector.broadcast %c0_i32_3 : i32 to vector<128x1xi32>
    %11 = arith.cmpi slt, %7, %10 : vector<128x1xi32>
    %c0_i32_4 = arith.constant 0 : i32
    %12 = arith.cmpi slt, %5, %c0_i32_4 : i32
    %13 = vector.broadcast %12 : i1 to vector<128x1xi1>
    %14 = vector.broadcast %13 : vector<128x1xi1> to vector<128x1xi1>
    %15 = arith.xori %11, %14 : vector<128x1xi1>
    %16 = arith.andi %15, %9 : vector<128x1xi1>
    %17 = vector.broadcast %5 : i32 to vector<128x1xi32>
    %18 = arith.addi %7, %17 : vector<128x1xi32>
    %19 = arith.select %16, %18, %7 : vector<128x1xi1>, vector<128x1xi32>
    %c0_i32_5 = arith.constant 0 : i32
    %20 = vector.broadcast %c0_i32_5 : i32 to vector<128x1xi32>
    %21 = arith.cmpi eq, %19, %20 : vector<128x1xi32>
    %c64_i32_6 = arith.constant 64 : i32
    %c0_i32_7 = arith.constant 0 : i32
    %22 = arith.cmpi eq, %c64_i32_6, %c0_i32_7 : i32
    %c1_i32_8 = arith.constant 1 : i32
    %23 = arith.select %22, %c1_i32_8, %c64_i32_6 : i32
    %24 = vector.broadcast %23 : i32 to vector<128x1xi32>
    %25 = arith.remsi %3, %24 : vector<128x1xi32>
    %c0_i32_9 = arith.constant 0 : i32
    %26 = vector.broadcast %c0_i32_9 : i32 to vector<128x1xi32>
    %27 = arith.cmpi ne, %25, %26 : vector<128x1xi32>
    %c0_i32_10 = arith.constant 0 : i32
    %28 = vector.broadcast %c0_i32_10 : i32 to vector<128x1xi32>
    %29 = arith.cmpi slt, %25, %28 : vector<128x1xi32>
    %c0_i32_11 = arith.constant 0 : i32
    %30 = arith.cmpi slt, %23, %c0_i32_11 : i32
    %31 = vector.broadcast %30 : i1 to vector<128x1xi1>
    %32 = vector.broadcast %31 : vector<128x1xi1> to vector<128x1xi1>
    %33 = arith.xori %29, %32 : vector<128x1xi1>
    %34 = arith.andi %33, %27 : vector<128x1xi1>
    %35 = vector.broadcast %23 : i32 to vector<128x1xi32>
    %36 = arith.addi %25, %35 : vector<128x1xi32>
    %37 = arith.select %34, %36, %25 : vector<128x1xi1>, vector<128x1xi32>
    %c63_i32 = arith.constant 63 : i32
    %38 = vector.broadcast %c63_i32 : i32 to vector<128x1xi32>
    %39 = arith.cmpi eq, %37, %38 : vector<128x1xi32>
    %c1_i32_12 = arith.constant 1 : i32
    %40 = tpu.dynamic_rotate %2 by %c1_i32_12 dim 0 : vector<128x16xf32>, i32 -> vector<128x16xf32>
    %cst = arith.constant 0.000000e+00 : f32
    %41 = vector.shape_cast %21 : vector<128x1xi1> to vector<128x1xi1>
    %42 = vector.broadcast %41 : vector<128x1xi1> to vector<128x16xi1>
    %43 = vector.broadcast %cst : f32 to vector<128x16xf32>
    %44 = arith.select %42, %43, %40 : vector<128x16xi1>, vector<128x16xf32>
    %c127_i32 = arith.constant 127 : i32
    %45 = tpu.dynamic_rotate %2 by %c127_i32 dim 0 : vector<128x16xf32>, i32 -> vector<128x16xf32>
    %cst_13 = arith.constant 0.000000e+00 : f32
    %46 = vector.shape_cast %39 : vector<128x1xi1> to vector<128x1xi1>
    %47 = vector.broadcast %46 : vector<128x1xi1> to vector<128x16xi1>
    %48 = vector.broadcast %cst_13 : f32 to vector<128x16xf32>
    %49 = arith.select %47, %48, %45 : vector<128x16xi1>, vector<128x16xf32>
    %50 = tpu.concatenate %44, %2, %49 in 1 : vector<128x16xf32>, vector<128x16xf32>, vector<128x16xf32> -> vector<128x48xf32>
    %51 = arith.truncf %50 : vector<128x48xf32> to vector<128x48xbf16>
    %c0_14 = arith.constant 0 : index
    %c0_15 = arith.constant 0 : index
    %52 = vector.load %arg2[%c0_14, %c0_15] : memref<48x32xbf16, #tpu.memory_space<vmem>>, vector<48x32xbf16>
    %cst_16 = arith.constant dense<0.000000e+00> : vector<128x32xf32>
    %53 = tpu.matmul %51, %52, %cst_16 {dimension_numbers = #tpu.dot_dimension_numbers<[1], [0], [0], [1], [0, 0, 1, 1], [], []>} : vector<128x48xbf16>, vector<48x32xbf16>, vector<128x32xf32> -> vector<128x32xf32>
    %c0_17 = arith.constant 0 : index
    %c0_18 = arith.constant 0 : index
    %54 = vector.load %arg3[%c0_17, %c0_18] : memref<1x32xf32, #tpu.memory_space<vmem>>, vector<1x32xf32>
    %55 = vector.broadcast %54 : vector<1x32xf32> to vector<128x32xf32>
    %56 = arith.addf %53, %55 : vector<128x32xf32>
    %cst_19 = arith.constant 0.000000e+00 : f32
    %57 = vector.broadcast %cst_19 : f32 to vector<128x32xf32>
    %58 = arith.maximumf %56, %57 : vector<128x32xf32>
    %c1_i32_20 = arith.constant 1 : i32
    %59 = tpu.dynamic_rotate %58 by %c1_i32_20 dim 0 : vector<128x32xf32>, i32 -> vector<128x32xf32>
    %cst_21 = arith.constant 0.000000e+00 : f32
    %60 = vector.shape_cast %21 : vector<128x1xi1> to vector<128x1xi1>
    %61 = vector.broadcast %60 : vector<128x1xi1> to vector<128x32xi1>
    %62 = vector.broadcast %cst_21 : f32 to vector<128x32xf32>
    %63 = arith.select %61, %62, %59 : vector<128x32xi1>, vector<128x32xf32>
    %c127_i32_22 = arith.constant 127 : i32
    %64 = tpu.dynamic_rotate %58 by %c127_i32_22 dim 0 : vector<128x32xf32>, i32 -> vector<128x32xf32>
    %cst_23 = arith.constant 0.000000e+00 : f32
    %65 = vector.shape_cast %39 : vector<128x1xi1> to vector<128x1xi1>
    %66 = vector.broadcast %65 : vector<128x1xi1> to vector<128x32xi1>
    %67 = vector.broadcast %cst_23 : f32 to vector<128x32xf32>
    %68 = arith.select %66, %67, %64 : vector<128x32xi1>, vector<128x32xf32>
    %69 = tpu.concatenate %63, %58, %68 in 1 : vector<128x32xf32>, vector<128x32xf32>, vector<128x32xf32> -> vector<128x96xf32>
    %70 = arith.truncf %69 : vector<128x96xf32> to vector<128x96xbf16>
    %c0_24 = arith.constant 0 : index
    %c0_25 = arith.constant 0 : index
    %71 = vector.load %arg4[%c0_24, %c0_25] : memref<96x32xbf16, #tpu.memory_space<vmem>>, vector<96x32xbf16>
    %cst_26 = arith.constant dense<0.000000e+00> : vector<128x32xf32>
    %72 = tpu.matmul %70, %71, %cst_26 {dimension_numbers = #tpu.dot_dimension_numbers<[1], [0], [0], [1], [0, 0, 1, 1], [], []>} : vector<128x96xbf16>, vector<96x32xbf16>, vector<128x32xf32> -> vector<128x32xf32>
    %c0_27 = arith.constant 0 : index
    %c0_28 = arith.constant 0 : index
    %73 = vector.load %arg5[%c0_27, %c0_28] : memref<1x32xf32, #tpu.memory_space<vmem>>, vector<1x32xf32>
    %74 = vector.broadcast %73 : vector<1x32xf32> to vector<128x32xf32>
    %75 = arith.addf %72, %74 : vector<128x32xf32>
    %76 = vector.shape_cast %75 : vector<128x32xf32> to vector<2x64x32xf32>
    %cst_29 = arith.constant dense<0.000000e+00> : vector<2x32xf32>
    %77 = vector.multi_reduction <add>, %76, %cst_29 [1] : vector<2x64x32xf32> to vector<2x32xf32>
    %cst_30 = arith.constant 6.400000e+01 : f32
    %78 = vector.broadcast %cst_30 : f32 to vector<2x32xf32>
    %79 = arith.divf %77, %78 : vector<2x32xf32>
    %c0_31 = arith.constant 0 : index
    %c0_32 = arith.constant 0 : index
    %80 = vector.load %arg6[%c0_31, %c0_32] : memref<32x2xf32, #tpu.memory_space<vmem>>, vector<32x2xf32>
    %cst_33 = arith.constant dense<0.000000e+00> : vector<2x2xf32>
    %81 = tpu.matmul %79, %80, %cst_33 {dimension_numbers = #tpu.dot_dimension_numbers<[1], [0], [0], [1], [0, 0, 1, 1], [], []>} : vector<2x32xf32>, vector<32x2xf32>, vector<2x2xf32> -> vector<2x2xf32>
    %cst_34 = arith.constant 0.000000e+00 : f32
    %82 = vector.broadcast %cst_34 : f32 to vector<2x2xf32>
    %83 = arith.maximumf %81, %82 : vector<2x2xf32>
    %c0_35 = arith.constant 0 : index
    %c0_36 = arith.constant 0 : index
    %84 = vector.load %arg7[%c0_35, %c0_36] : memref<2x32xf32, #tpu.memory_space<vmem>>, vector<2x32xf32>
    %cst_37 = arith.constant dense<0.000000e+00> : vector<2x32xf32>
    %85 = tpu.matmul %83, %84, %cst_37 {dimension_numbers = #tpu.dot_dimension_numbers<[1], [0], [0], [1], [0, 0, 1, 1], [], []>} : vector<2x2xf32>, vector<2x32xf32>, vector<2x32xf32> -> vector<2x32xf32>
    %86 = arith.negf %85 : vector<2x32xf32>
    %87 = math.exp %86 : vector<2x32xf32>
    %cst_38 = arith.constant 1.000000e+00 : f32
    %88 = vector.broadcast %cst_38 : f32 to vector<2x32xf32>
    %89 = arith.addf %88, %87 : vector<2x32xf32>
    %90 = arith.divf %88, %89 : vector<2x32xf32>
    %91 = vector.shape_cast %90 : vector<2x32xf32> to vector<2x1x32xf32>
    %92 = vector.broadcast %91 : vector<2x1x32xf32> to vector<2x64x32xf32>
    %93 = arith.mulf %76, %92 : vector<2x64x32xf32>
    %94 = arith.truncf %2 : vector<128x16xf32> to vector<128x16xbf16>
    %c0_39 = arith.constant 0 : index
    %c0_40 = arith.constant 0 : index
    %95 = vector.load %arg8[%c0_39, %c0_40] : memref<16x32xbf16, #tpu.memory_space<vmem>>, vector<16x32xbf16>
    %cst_41 = arith.constant dense<0.000000e+00> : vector<128x32xf32>
    %96 = tpu.matmul %94, %95, %cst_41 {dimension_numbers = #tpu.dot_dimension_numbers<[1], [0], [0], [1], [0, 0, 1, 1], [], []>} : vector<128x16xbf16>, vector<16x32xbf16>, vector<128x32xf32> -> vector<128x32xf32>
    %c0_42 = arith.constant 0 : index
    %c0_43 = arith.constant 0 : index
    %97 = vector.load %arg9[%c0_42, %c0_43] : memref<1x32xf32, #tpu.memory_space<vmem>>, vector<1x32xf32>
    %98 = vector.broadcast %97 : vector<1x32xf32> to vector<128x32xf32>
    %99 = arith.addf %96, %98 : vector<128x32xf32>
    %100 = vector.shape_cast %99 : vector<128x32xf32> to vector<2x64x32xf32>
    %101 = arith.addf %93, %100 : vector<2x64x32xf32>
    %cst_44 = arith.constant 0.000000e+00 : f32
    %102 = vector.broadcast %cst_44 : f32 to vector<2x64x32xf32>
    %103 = arith.maximumf %101, %102 : vector<2x64x32xf32>
    %104 = tpu.transpose %103, [0, 2, 1] : vector<2x64x32xf32> -> vector<2x32x64xf32>
    %c0_45 = arith.constant 0 : index
    %c0_46 = arith.constant 0 : index
    %c0_47 = arith.constant 0 : index
    %105 = vector.load %arg10[%c0_45, %c0_46, %c0_47] : memref<2x32x64xf32, #tpu.memory_space<vmem>>, vector<2x32x64xf32>
    tpu.vector_store %arg10[%c0_45, %c0_46, %c0_47], %104 {strides = array<i32>} : memref<2x32x64xf32, #tpu.memory_space<vmem>>, vector<2x32x64xf32>,
    return
  }
  func.func @transform_0(%arg0: i32) -> (i32, i32, i32) {
    %c0_i32 = arith.constant 0 : i32
    %c0_i32_0 = arith.constant 0 : i32
    %c0_i32_1 = arith.constant 0 : i32
    return %arg0, %c0_i32, %c0_i32_0 : i32, i32, i32
  }
  func.func @transform_1(%arg0: i32) -> (i32, i32) {
    %c0_i32 = arith.constant 0 : i32
    %c0_i32_0 = arith.constant 0 : i32
    %c0_i32_1 = arith.constant 0 : i32
    return %c0_i32, %c0_i32_0 : i32, i32
  }
  func.func @transform_2(%arg0: i32) -> (i32, i32) {
    %c0_i32 = arith.constant 0 : i32
    %c0_i32_0 = arith.constant 0 : i32
    %c0_i32_1 = arith.constant 0 : i32
    return %c0_i32, %c0_i32_0 : i32, i32
  }
  func.func @transform_3(%arg0: i32) -> (i32, i32) {
    %c0_i32 = arith.constant 0 : i32
    %c0_i32_0 = arith.constant 0 : i32
    %c0_i32_1 = arith.constant 0 : i32
    return %c0_i32, %c0_i32_0 : i32, i32
  }
  func.func @transform_4(%arg0: i32) -> (i32, i32) {
    %c0_i32 = arith.constant 0 : i32
    %c0_i32_0 = arith.constant 0 : i32
    %c0_i32_1 = arith.constant 0 : i32
    return %c0_i32, %c0_i32_0 : i32, i32
  }
  func.func @transform_5(%arg0: i32) -> (i32, i32) {
    %c0_i32 = arith.constant 0 : i32
    %c0_i32_0 = arith.constant 0 : i32
    %c0_i32_1 = arith.constant 0 : i32
    return %c0_i32, %c0_i32_0 : i32, i32
  }
  func.func @transform_6(%arg0: i32) -> (i32, i32) {
    %c0_i32 = arith.constant 0 : i32
    %c0_i32_0 = arith.constant 0 : i32
    %c0_i32_1 = arith.constant 0 : i32
    return %c0_i32, %c0_i32_0 : i32, i32
  }
  func.func @transform_7(%arg0: i32) -> (i32, i32) {
    %c0_i32 = arith.constant 0 : i32
    %c0_i32_0 = arith.constant 0 : i32
    %c0_i32_1 = arith.constant 0 : i32
    return %c0_i32, %c0_i32_0 : i32, i32
  }
  func.func @transform_8(%arg0: i32) -> (i32, i32) {
    %c0_i32 = arith.constant 0 : i32
    %c0_i32_0 = arith.constant 0 : i32
    %c0_i32_1 = arith.constant 0 : i32
    return %c0_i32, %c0_i32_0 : i32, i32
  }
  func.func @transform_9(%arg0: i32) -> (i32, i32, i32) {
    %c0_i32 = arith.constant 0 : i32
    %c0_i32_0 = arith.constant 0 : i32
    %c0_i32_1 = arith.constant 0 : i32
    return %arg0, %c0_i32, %c0_i32_0 : i32, i32, i32
  }
}

</mosaic_0001>

<llo_original>
// kernel: tpu_custom_call.1
$region0: #{tpu_custom_call.1}
  #allocation0 [shape = 'u32[]', space=smem, size = 0x4, offset = 0x4, fixed_abs, tag = 'smem constant byte address 0x4 - core index']
  #allocation1 [shape = 'u32[144,128]{1,0:T(1,128)}', space=vmem, size = 0x12000, scoped, tag = 'internal scratch']
  %s0 = inlined_call_operand.vmem [shape: f32[2,16,64], index: 0, kind: input, shape index: {}]
  %s1 = inlined_call_operand.vmem [shape: bf16[48,32], index: 1, kind: input, shape index: {}]
  %s2 = inlined_call_operand.vmem [shape: f32[1,32], index: 2, kind: input, shape index: {}]
  %s3 = inlined_call_operand.vmem [shape: bf16[96,32], index: 3, kind: input, shape index: {}]
  %s4 = inlined_call_operand.vmem [shape: f32[1,32], index: 4, kind: input, shape index: {}]
  %s5 = inlined_call_operand.vmem [shape: f32[32,2], index: 5, kind: input, shape index: {}]
  %s6 = inlined_call_operand.vmem [shape: f32[2,32], index: 6, kind: input, shape index: {}]
  %s7 = inlined_call_operand.vmem [shape: bf16[16,32], index: 7, kind: input, shape index: {}]
  %s8 = inlined_call_operand.vmem [shape: f32[1,32], index: 8, kind: input, shape index: {}]
  %s9 = inlined_call_operand.hbm [shape: f32[2,32,64], index: 9, kind: output, shape index: {}]
  %s10 = sld [smem:[#allocation0]]
  $region46: #{tpu_custom_call.1} parent=0
    _
  %s12 = ssub.s32 1, %s10
  %s13 = scalar_select 0, %s12, %s10
  $region1: #{tpu_custom_call.1} parent=0
    #allocation2 [shape = 'u8[32768]{0}', space=vmem, size = 0x8000, scoped, tag = 'output window, operand 0, single buffered']
    #allocation3 [shape = 's32[1]{0}', space=sflag, size = 0x4, scoped, tag = 'scoped memory for tpu_custom_call.1']
    %14 = vsyncpa [#allocation3], 0
    // Predicated region
    $region2: #{tpu_custom_call.1} parent=1 // pred_check
      _
    $region3: #{tpu_custom_call.1} parent=1 // pred_check_branch
      %16 = sbr.rel (0) target = $region5
    $region4: #{tpu_custom_call.1} parent=1 // pred_region
      _
    $region5: #{tpu_custom_call.1} parent=1 // pred_fallthru
      _
    // Predicated region
    $region6: #{tpu_custom_call.1} parent=1 // pred_check
      _
    $region7: #{tpu_custom_call.1} parent=1 // pred_check_branch
      %18 = sbr.rel (0) target = $region9
    $region8: #{tpu_custom_call.1} parent=1 // pred_region
      _
    $region9: #{tpu_custom_call.1} parent=1 // pred_fallthru
      _
    // Predicated region
    $region10: #{tpu_custom_call.1} parent=1 // pred_check
      _
    $region11: #{tpu_custom_call.1} parent=1 // pred_check_branch
      %20 = sbr.rel (0) target = $region13
    $region12: #{tpu_custom_call.1} parent=1 // pred_region
      _
    $region13: #{tpu_custom_call.1} parent=1 // pred_fallthru
      _
    // Predicated region
    $region14: #{tpu_custom_call.1} parent=1 // pred_check
      _
    $region15: #{tpu_custom_call.1} parent=1 // pred_check_branch
      %22 = sbr.rel (0) target = $region17
    $region16: #{tpu_custom_call.1} parent=1 // pred_region
      _
    $region17: #{tpu_custom_call.1} parent=1 // pred_fallthru
      _
    // Predicated region
    $region18: #{tpu_custom_call.1} parent=1 // pred_check
      _
    $region19: #{tpu_custom_call.1} parent=1 // pred_check_branch
      %24 = sbr.rel (0) target = $region21
    $region20: #{tpu_custom_call.1} parent=1 // pred_region
      _
    $region21: #{tpu_custom_call.1} parent=1 // pred_fallthru
      _
    // Predicated region
    $region22: #{tpu_custom_call.1} parent=1 // pred_check
      _
    $region23: #{tpu_custom_call.1} parent=1 // pred_check_branch
      %26 = sbr.rel (0) target = $region25
    $region24: #{tpu_custom_call.1} parent=1 // pred_region
      _
    $region25: #{tpu_custom_call.1} parent=1 // pred_fallthru
      _
    // Predicated region
    $region26: #{tpu_custom_call.1} parent=1 // pred_check
      _
    $region27: #{tpu_custom_call.1} parent=1 // pred_check_branch
      %28 = sbr.rel (0) target = $region29
    $region28: #{tpu_custom_call.1} parent=1 // pred_region
      _
    $region29: #{tpu_custom_call.1} parent=1 // pred_fallthru
      _
    // Predicated region
    $region30: #{tpu_custom_call.1} parent=1 // pred_check
      _
    $region31: #{tpu_custom_call.1} parent=1 // pred_check_branch
      %30 = sbr.rel (0) target = $region33
    $region32: #{tpu_custom_call.1} parent=1 // pred_region
      _
    $region33: #{tpu_custom_call.1} parent=1 // pred_fallthru
      _
    // Predicated region
    $region34: #{tpu_custom_call.1} parent=1 // pred_check
      _
    $region35: #{tpu_custom_call.1} parent=1 // pred_check_branch
      %32 = sbr.rel (0) target = $region37
    $region36: #{tpu_custom_call.1} parent=1 // pred_region
      _
    $region37: #{tpu_custom_call.1} parent=1 // pred_fallthru
      _
    %v34 = vld [vmem:[%s0] sm:$0xff]
    %v35 = vld [vmem:[%s0 + $0x8] sm:$0xff]
    %v36 = vld [vmem:[%s0 + $0x10] sm:$0xff]
    %v37 = vld [vmem:[%s0 + $0x18] sm:$0xff]
    %38 = vxpose.xlu0.b32.start [1/16] %v34, 128
    %39 = vxpose.xlu0.b32.cont [2/16] %v35, 128
    %40 = vxpose.xlu0.b32.cont [3/16] 0.0, 128
    %41 = vxpose.xlu0.b32.cont [4/16] 0.0, 128
    %42 = vxpose.xlu0.b32.cont [5/16] 0.0, 128
    %43 = vxpose.xlu0.b32.cont [6/16] 0.0, 128
    %44 = vxpose.xlu0.b32.cont [7/16] 0.0, 128
    %45 = vxpose.xlu0.b32.cont [8/16] 0.0, 128
    %46 = vxpose.xlu0.b32.cont [9/16] 0.0, 128
    %47 = vxpose.xlu0.b32.cont [10/16] 0.0, 128
    %48 = vxpose.xlu0.b32.cont [11/16] 0.0, 128
    %49 = vxpose.xlu0.b32.cont [12/16] 0.0, 128
    %50 = vxpose.xlu0.b32.cont [13/16] 0.0, 128
    %51 = vxpose.xlu0.b32.cont [14/16] 0.0, 128
    %52 = vxpose.xlu0.b32.cont [15/16] 0.0, 128
    %53 = vxpose.xlu0.b32.end [16/16] 0.0, 128
    %v54 = vpop.trf.xlu0
    %v55 = vpop.trf.xlu0
    %v56 = vpop.trf.xlu0
    %v57 = vpop.trf.xlu0
    %v58 = vpop.trf.xlu0
    %v59 = vpop.trf.xlu0
    %v60 = vpop.trf.xlu0
    %v61 = vpop.trf.xlu0
    %v62 = vpop.trf.xlu0
    %v63 = vpop.trf.xlu0
    %v64 = vpop.trf.xlu0
    %v65 = vpop.trf.xlu0
    %v66 = vpop.trf.xlu0
    %v67 = vpop.trf.xlu0
    %v68 = vpop.trf.xlu0
    %v69 = vpop.trf.xlu0
    %70 = vxpose.xlu0.b32.start [1/16] %v36, 128
    %71 = vxpose.xlu0.b32.cont [2/16] %v37, 128
    %72 = vxpose.xlu0.b32.cont [3/16] 0.0, 128
    %73 = vxpose.xlu0.b32.cont [4/16] 0.0, 128
    %74 = vxpose.xlu0.b32.cont [5/16] 0.0, 128
    %75 = vxpose.xlu0.b32.cont [6/16] 0.0, 128
    %76 = vxpose.xlu0.b32.cont [7/16] 0.0, 128
    %77 = vxpose.xlu0.b32.cont [8/16] 0.0, 128
    %78 = vxpose.xlu0.b32.cont [9/16] 0.0, 128
    %79 = vxpose.xlu0.b32.cont [10/16] 0.0, 128
    %80 = vxpose.xlu0.b32.cont [11/16] 0.0, 128
    %81 = vxpose.xlu0.b32.cont [12/16] 0.0, 128
    %82 = vxpose.xlu0.b32.cont [13/16] 0.0, 128
    %83 = vxpose.xlu0.b32.cont [14/16] 0.0, 128
    %84 = vxpose.xlu0.b32.cont [15/16] 0.0, 128
    %85 = vxpose.xlu0.b32.end [16/16] 0.0, 128
    %v86 = vpop.trf.xlu0
    %v87 = vpop.trf.xlu0
    %v88 = vpop.trf.xlu0
    %v89 = vpop.trf.xlu0
    %v90 = vpop.trf.xlu0
    %v91 = vpop.trf.xlu0
    %v92 = vpop.trf.xlu0
    %v93 = vpop.trf.xlu0
    %v94 = vpop.trf.xlu0
    %v95 = vpop.trf.xlu0
    %v96 = vpop.trf.xlu0
    %v97 = vpop.trf.xlu0
    %v98 = vpop.trf.xlu0
    %v99 = vpop.trf.xlu0
    %v100 = vpop.trf.xlu0
    %v101 = vpop.trf.xlu0
    %v102 = vlaneseq
    %v103 = vshrl.u32 %v102, 7
    %v104 = vadd.s32 %v103, 8
    %v105 = vadd.s32 %v103, 16
    %v106 = vadd.s32 %v103, 24
    %v107 = vadd.s32 %v103, 32
    %v108 = vadd.s32 %v103, 40
    %v109 = vadd.s32 %v103, 48
    %v110 = vadd.s32 %v103, 56
    %v111 = vadd.s32 %v103, 64
    %v112 = vadd.s32 %v103, 72
    %v113 = vadd.s32 %v103, 80
    %v114 = vadd.s32 %v103, 88
    %v115 = vadd.s32 %v103, 96
    %v116 = vadd.s32 %v103, 104
    %v117 = vadd.s32 %v103, 112
    %v118 = vadd.s32 %v103, 120
    %vm119 = vcmp.lt.s32.totalorder %v103, 0
    %v120 = vsub.s32 0, %v103
    %v121 = vsel %vm119, %v120, %v103
    %v122 = vshrl.u32 %v121, 6
    %v123 = vand.u32 %v121, 63
    %v124 = vsub.s32 0, %v123
    %v125 = vsel %vm119, %v124, %v123
    %vm126 = vcmp.lt.s32.totalorder %v104, 0
    %v127 = vsub.s32 0, %v104
    %v128 = vsel %vm126, %v127, %v104
    %v129 = vshrl.u32 %v128, 6
    %v130 = vand.u32 %v128, 63
    %v131 = vsub.s32 0, %v130
    %v132 = vsel %vm126, %v131, %v130
    %vm133 = vcmp.lt.s32.totalorder %v105, 0
    %v134 = vsub.s32 0, %v105
    %v135 = vsel %vm133, %v134, %v105
    %v136 = vshrl.u32 %v135, 6
    %v137 = vand.u32 %v135, 63
    %v138 = vsub.s32 0, %v137
    %v139 = vsel %vm133, %v138, %v137
    %vm140 = vcmp.lt.s32.totalorder %v106, 0
    %v141 = vsub.s32 0, %v106
    %v142 = vsel %vm140, %v141, %v106
    %v143 = vshrl.u32 %v142, 6
    %v144 = vand.u32 %v142, 63
    %v145 = vsub.s32 0, %v144
    %v146 = vsel %vm140, %v145, %v144
    %vm147 = vcmp.lt.s32.totalorder %v107, 0
    %v148 = vsub.s32 0, %v107
    %v149 = vsel %vm147, %v148, %v107
    %v150 = vshrl.u32 %v149, 6
    %v151 = vand.u32 %v149, 63
    %v152 = vsub.s32 0, %v151
    %v153 = vsel %vm147, %v152, %v151
    %vm154 = vcmp.lt.s32.totalorder %v108, 0
    %v155 = vsub.s32 0, %v108
    %v156 = vsel %vm154, %v155, %v108
    %v157 = vshrl.u32 %v156, 6
    %v158 = vand.u32 %v156, 63
    %v159 = vsub.s32 0, %v158
    %v160 = vsel %vm154, %v159, %v158
    %vm161 = vcmp.lt.s32.totalorder %v109, 0
    %v162 = vsub.s32 0, %v109
    %v163 = vsel %vm161, %v162, %v109
    %v164 = vshrl.u32 %v163, 6
    %v165 = vand.u32 %v163, 63
    %v166 = vsub.s32 0, %v165
    %v167 = vsel %vm161, %v166, %v165
    %vm168 = vcmp.lt.s32.totalorder %v110, 0
    %v169 = vsub.s32 0, %v110
    %v170 = vsel %vm168, %v169, %v110
    %v171 = vshrl.u32 %v170, 6
    %v172 = vand.u32 %v170, 63
    %v173 = vsub.s32 0, %v172
    %v174 = vsel %vm168, %v173, %v172
    %vm175 = vcmp.lt.s32.totalorder %v111, 0
    %v176 = vsub.s32 0, %v111
    %v177 = vsel %vm175, %v176, %v111
    %v178 = vshrl.u32 %v177, 6
    %v179 = vand.u32 %v177, 63
    %v180 = vsub.s32 0, %v179
    %v181 = vsel %vm175, %v180, %v179
    %vm182 = vcmp.lt.s32.totalorder %v112, 0
    %v183 = vsub.s32 0, %v112
    %v184 = vsel %vm182, %v183, %v112
    %v185 = vshrl.u32 %v184, 6
    %v186 = vand.u32 %v184, 63
    %v187 = vsub.s32 0, %v186
    %v188 = vsel %vm182, %v187, %v186
    %vm189 = vcmp.lt.s32.totalorder %v113, 0
    %v190 = vsub.s32 0, %v113
    %v191 = vsel %vm189, %v190, %v113
    %v192 = vshrl.u32 %v191, 6
    %v193 = vand.u32 %v191, 63
    %v194 = vsub.s32 0, %v193
    %v195 = vsel %vm189, %v194, %v193
    %vm196 = vcmp.lt.s32.totalorder %v114, 0
    %v197 = vsub.s32 0, %v114
    %v198 = vsel %vm196, %v197, %v114
    %v199 = vshrl.u32 %v198, 6
    %v200 = vand.u32 %v198, 63
    %v201 = vsub.s32 0, %v200
    %v202 = vsel %vm196, %v201, %v200
    %vm203 = vcmp.lt.s32.totalorder %v115, 0
    %v204 = vsub.s32 0, %v115
    %v205 = vsel %vm203, %v204, %v115
    %v206 = vshrl.u32 %v205, 6
    %v207 = vand.u32 %v205, 63
    %v208 = vsub.s32 0, %v207
    %v209 = vsel %vm203, %v208, %v207
    %vm210 = vcmp.lt.s32.totalorder %v116, 0
    %v211 = vsub.s32 0, %v116
    %v212 = vsel %vm210, %v211, %v116
    %v213 = vshrl.u32 %v212, 6
    %v214 = vand.u32 %v212, 63
    %v215 = vsub.s32 0, %v214
    %v216 = vsel %vm210, %v215, %v214
    %vm217 = vcmp.lt.s32.totalorder %v117, 0
    %v218 = vsub.s32 0, %v117
    %v219 = vsel %vm217, %v218, %v117
    %v220 = vshrl.u32 %v219, 6
    %v221 = vand.u32 %v219, 63
    %v222 = vsub.s32 0, %v221
    %v223 = vsel %vm217, %v222, %v221
    %vm224 = vcmp.lt.s32.totalorder %v118, 0
    %v225 = vsub.s32 0, %v118
    %v226 = vsel %vm224, %v225, %v118
    %v227 = vshrl.u32 %v226, 6
    %v228 = vand.u32 %v226, 63
    %v229 = vsub.s32 0, %v228
    %v230 = vsel %vm224, %v229, %v228
    %vm231 = vcmp.ne.s32.totalorder %v125, 0
    %vm232 = vcmp.ne.s32.totalorder %v132, 0
    %vm233 = vcmp.ne.s32.totalorder %v139, 0
    %vm234 = vcmp.ne.s32.totalorder %v146, 0
    %vm235 = vcmp.ne.s32.totalorder %v153, 0
    %vm236 = vcmp.ne.s32.totalorder %v160, 0
    %vm237 = vcmp.ne.s32.totalorder %v167, 0
    %vm238 = vcmp.ne.s32.totalorder %v174, 0
    %vm239 = vcmp.ne.s32.totalorder %v181, 0
    %vm240 = vcmp.ne.s32.totalorder %v188, 0
    %vm241 = vcmp.ne.s32.totalorder %v195, 0
    %vm242 = vcmp.ne.s32.totalorder %v202, 0
    %vm243 = vcmp.ne.s32.totalorder %v209, 0
    %vm244 = vcmp.ne.s32.totalorder %v216, 0
    %vm245 = vcmp.ne.s32.totalorder %v223, 0
    %vm246 = vcmp.ne.s32.totalorder %v230, 0
    %vm247 = vcmp.lt.s32.totalorder %v125, 0
    %vm248 = vcmp.lt.s32.totalorder %v132, 0
    %vm249 = vcmp.lt.s32.totalorder %v139, 0
    %vm250 = vcmp.lt.s32.totalorder %v146, 0
    %vm251 = vcmp.lt.s32.totalorder %v153, 0
    %vm252 = vcmp.lt.s32.totalorder %v160, 0
    %vm253 = vcmp.lt.s32.totalorder %v167, 0
    %vm254 = vcmp.lt.s32.totalorder %v174, 0
    %vm255 = vcmp.lt.s32.totalorder %v181, 0
    %vm256 = vcmp.lt.s32.totalorder %v188, 0
    %vm257 = vcmp.lt.s32.totalorder %v195, 0
    %vm258 = vcmp.lt.s32.totalorder %v202, 0
    %vm259 = vcmp.lt.s32.totalorder %v209, 0
    %vm260 = vcmp.lt.s32.totalorder %v216, 0
    %vm261 = vcmp.lt.s32.totalorder %v223, 0
    %vm262 = vcmp.lt.s32.totalorder %v230, 0
    %vm263 = vmand %vm247, %vm231
    %vm264 = vmand %vm248, %vm232
    %vm265 = vmand %vm249, %vm233
    %vm266 = vmand %vm250, %vm234
    %vm267 = vmand %vm251, %vm235
    %vm268 = vmand %vm252, %vm236
    %vm269 = vmand %vm253, %vm237
    %vm270 = vmand %vm254, %vm238
    %vm271 = vmand %vm255, %vm239
    %vm272 = vmand %vm256, %vm240
    %vm273 = vmand %vm257, %vm241
    %vm274 = vmand %vm258, %vm242
    %vm275 = vmand %vm259, %vm243
    %vm276 = vmand %vm260, %vm244
    %vm277 = vmand %vm261, %vm245
    %vm278 = vmand %vm262, %vm246
    %v279 = vadd.s32 %v125, 64
    %v280 = vadd.s32 %v132, 64
    %v281 = vadd.s32 %v139, 64
    %v282 = vadd.s32 %v146, 64
    %v283 = vadd.s32 %v153, 64
    %v284 = vadd.s32 %v160, 64
    %v285 = vadd.s32 %v167, 64
    %v286 = vadd.s32 %v174, 64
    %v287 = vadd.s32 %v181, 64
    %v288 = vadd.s32 %v188, 64
    %v289 = vadd.s32 %v195, 64
    %v290 = vadd.s32 %v202, 64
    %v291 = vadd.s32 %v209, 64
    %v292 = vadd.s32 %v216, 64
    %v293 = vadd.s32 %v223, 64
    %v294 = vadd.s32 %v230, 64
    %v295 = vsel %vm263, %v279, %v125
    %v296 = vsel %vm264, %v280, %v132
    %v297 = vsel %vm265, %v281, %v139
    %v298 = vsel %vm266, %v282, %v146
    %v299 = vsel %vm267, %v283, %v153
    %v300 = vsel %vm268, %v284, %v160
    %v301 = vsel %vm269, %v285, %v167
    %v302 = vsel %vm270, %v286, %v174
    %v303 = vsel %vm271, %v287, %v181
    %v304 = vsel %vm272, %v288, %v188
    %v305 = vsel %vm273, %v289, %v195
    %v306 = vsel %vm274, %v290, %v202
    %v307 = vsel %vm275, %v291, %v209
    %v308 = vsel %vm276, %v292, %v216
    %v309 = vsel %vm277, %v293, %v223
    %v310 = vsel %vm278, %v294, %v230
    %vm311 = vcmp.eq.s32.totalorder %v295, 0
    %vm312 = vcmp.eq.s32.totalorder %v296, 0
    %vm313 = vcmp.eq.s32.totalorder %v297, 0
    %vm314 = vcmp.eq.s32.totalorder %v298, 0
    %vm315 = vcmp.eq.s32.totalorder %v299, 0
    %vm316 = vcmp.eq.s32.totalorder %v300, 0
    %vm317 = vcmp.eq.s32.totalorder %v301, 0
    %vm318 = vcmp.eq.s32.totalorder %v302, 0
    %vm319 = vcmp.eq.s32.totalorder %v303, 0
    %vm320 = vcmp.eq.s32.totalorder %v304, 0
    %vm321 = vcmp.eq.s32.totalorder %v305, 0
    %vm322 = vcmp.eq.s32.totalorder %v306, 0
    %vm323 = vcmp.eq.s32.totalorder %v307, 0
    %vm324 = vcmp.eq.s32.totalorder %v308, 0
    %vm325 = vcmp.eq.s32.totalorder %v309, 0
    %vm326 = vcmp.eq.s32.totalorder %v310, 0
    %vm327 = vcmp.eq.s32.totalorder %v295, 63
    %vm328 = vcmp.eq.s32.totalorder %v296, 63
    %vm329 = vcmp.eq.s32.totalorder %v297, 63
    %vm330 = vcmp.eq.s32.totalorder %v298, 63
    %vm331 = vcmp.eq.s32.totalorder %v299, 63
    %vm332 = vcmp.eq.s32.totalorder %v300, 63
    %vm333 = vcmp.eq.s32.totalorder %v301, 63
    %vm334 = vcmp.eq.s32.totalorder %v302, 63
    %vm335 = vcmp.eq.s32.totalorder %v303, 63
    %vm336 = vcmp.eq.s32.totalorder %v304, 63
    %vm337 = vcmp.eq.s32.totalorder %v305, 63
    %vm338 = vcmp.eq.s32.totalorder %v306, 63
    %vm339 = vcmp.eq.s32.totalorder %v307, 63
    %vm340 = vcmp.eq.s32.totalorder %v308, 63
    %vm341 = vcmp.eq.s32.totalorder %v309, 63
    %vm342 = vcmp.eq.s32.totalorder %v310, 63
    %v343 = vrot.slane %v54, 7
    %v344 = vrot.slane %v55, 7
    %v345 = vrot.slane %v56, 7
    %v346 = vrot.slane %v57, 7
    %v347 = vrot.slane %v58, 7
    %v348 = vrot.slane %v59, 7
    %v349 = vrot.slane %v60, 7
    %v350 = vrot.slane %v61, 7
    %v351 = vrot.slane %v86, 7
    %v352 = vrot.slane %v87, 7
    %v353 = vrot.slane %v88, 7
    %v354 = vrot.slane %v89, 7
    %v355 = vrot.slane %v90, 7
    %v356 = vrot.slane %v91, 7
    %v357 = vrot.slane %v92, 7
    %v358 = vrot.slane %v93, 7
    %vm359 = vcmp.lt.s32.totalorder %v103, 1
    %v360 = vsel %vm359, %v357, %v358
    %v361 = vsel %vm359, %v356, %v357
    %v362 = vsel %vm359, %v355, %v356
    %v363 = vsel %vm359, %v354, %v355
    %v364 = vsel %vm359, %v353, %v354
    %v365 = vsel %vm359, %v352, %v353
    %v366 = vsel %vm359, %v351, %v352
    %v367 = vsel %vm359, %v350, %v351
    %v368 = vsel %vm359, %v349, %v350
    %v369 = vsel %vm359, %v348, %v349
    %v370 = vsel %vm359, %v347, %v348
    %v371 = vsel %vm359, %v346, %v347
    %v372 = vsel %vm359, %v345, %v346
    %v373 = vsel %vm359, %v344, %v345
    %v374 = vsel %vm359, %v343, %v344
    %v375 = vsel %vm359, %v358, %v343
    %v376 = vsel %vm311, 1, 0
    %v377 = vsel %vm312, 1, 0
    %v378 = vsel %vm313, 1, 0
    %v379 = vsel %vm314, 1, 0
    %v380 = vsel %vm315, 1, 0
    %v381 = vsel %vm316, 1, 0
    %v382 = vsel %vm317, 1, 0
    %v383 = vsel %vm318, 1, 0
    %v384 = vsel %vm319, 1, 0
    %v385 = vsel %vm320, 1, 0
    %v386 = vsel %vm321, 1, 0
    %v387 = vsel %vm322, 1, 0
    %v388 = vsel %vm323, 1, 0
    %v389 = vsel %vm324, 1, 0
    %v390 = vsel %vm325, 1, 0
    %v391 = vsel %vm326, 1, 0
    %vm392 = vcmp.eq.s32.totalorder %v376, 1
    %vm393 = vcmp.eq.s32.totalorder %v377, 1
    %vm394 = vcmp.eq.s32.totalorder %v378, 1
    %vm395 = vcmp.eq.s32.totalorder %v379, 1
    %vm396 = vcmp.eq.s32.totalorder %v380, 1
    %vm397 = vcmp.eq.s32.totalorder %v381, 1
    %vm398 = vcmp.eq.s32.totalorder %v382, 1
    %vm399 = vcmp.eq.s32.totalorder %v383, 1
    %vm400 = vcmp.eq.s32.totalorder %v384, 1
    %vm401 = vcmp.eq.s32.totalorder %v385, 1
    %vm402 = vcmp.eq.s32.totalorder %v386, 1
    %vm403 = vcmp.eq.s32.totalorder %v387, 1
    %vm404 = vcmp.eq.s32.totalorder %v388, 1
    %vm405 = vcmp.eq.s32.totalorder %v389, 1
    %vm406 = vcmp.eq.s32.totalorder %v390, 1
    %vm407 = vcmp.eq.s32.totalorder %v391, 1
    %v408 = vsel %vm392, 0.0, %v375
    %v409 = vsel %vm393, 0.0, %v374
    %v410 = vsel %vm394, 0.0, %v373
    %v411 = vsel %vm395, 0.0, %v372
    %v412 = vsel %vm396, 0.0, %v371
    %v413 = vsel %vm397, 0.0, %v370
    %v414 = vsel %vm398, 0.0, %v369
    %v415 = vsel %vm399, 0.0, %v368
    %v416 = vsel %vm400, 0.0, %v367
    %v417 = vsel %vm401, 0.0, %v366
    %v418 = vsel %vm402, 0.0, %v365
    %v419 = vsel %vm403, 0.0, %v364
    %v420 = vsel %vm404, 0.0, %v363
    %v421 = vsel %vm405, 0.0, %v362
    %v422 = vsel %vm406, 0.0, %v361
    %v423 = vsel %vm407, 0.0, %v360
    %v424 = vrot.slane %v54, 1
    %v425 = vrot.slane %v55, 1
    %v426 = vrot.slane %v56, 1
    %v427 = vrot.slane %v57, 1
    %v428 = vrot.slane %v58, 1
    %v429 = vrot.slane %v59, 1
    %v430 = vrot.slane %v60, 1
    %v431 = vrot.slane %v61, 1
    %v432 = vrot.slane %v86, 1
    %v433 = vrot.slane %v87, 1
    %v434 = vrot.slane %v88, 1
    %v435 = vrot.slane %v89, 1
    %v436 = vrot.slane %v90, 1
    %v437 = vrot.slane %v91, 1
    %v438 = vrot.slane %v92, 1
    %v439 = vrot.slane %v93, 1
    %vm440 = vcmp.lt.s32.totalorder %v103, 7
    %v441 = vsel %vm440, %v438, %v439
    %v442 = vsel %vm440, %v437, %v438
    %v443 = vsel %vm440, %v436, %v437
    %v444 = vsel %vm440, %v435, %v436
    %v445 = vsel %vm440, %v434, %v435
    %v446 = vsel %vm440, %v433, %v434
    %v447 = vsel %vm440, %v432, %v433
    %v448 = vsel %vm440, %v431, %v432
    %v449 = vsel %vm440, %v430, %v431
    %v450 = vsel %vm440, %v429, %v430
    %v451 = vsel %vm440, %v428, %v429
    %v452 = vsel %vm440, %v427, %v428
    %v453 = vsel %vm440, %v426, %v427
    %v454 = vsel %vm440, %v425, %v426
    %v455 = vsel %vm440, %v424, %v425
    %v456 = vsel %vm440, %v439, %v424
    %v457 = vsel %vm327, 1, 0
    %v458 = vsel %vm328, 1, 0
    %v459 = vsel %vm329, 1, 0
    %v460 = vsel %vm330, 1, 0
    %v461 = vsel %vm331, 1, 0
    %v462 = vsel %vm332, 1, 0
    %v463 = vsel %vm333, 1, 0
    %v464 = vsel %vm334, 1, 0
    %v465 = vsel %vm335, 1, 0
    %v466 = vsel %vm336, 1, 0
    %v467 = vsel %vm337, 1, 0
    %v468 = vsel %vm338, 1, 0
    %v469 = vsel %vm339, 1, 0
    %v470 = vsel %vm340, 1, 0
    %v471 = vsel %vm341, 1, 0
    %v472 = vsel %vm342, 1, 0
    %vm473 = vcmp.eq.s32.totalorder %v457, 1
    %vm474 = vcmp.eq.s32.totalorder %v458, 1
    %vm475 = vcmp.eq.s32.totalorder %v459, 1
    %vm476 = vcmp.eq.s32.totalorder %v460, 1
    %vm477 = vcmp.eq.s32.totalorder %v461, 1
    %vm478 = vcmp.eq.s32.totalorder %v462, 1
    %vm479 = vcmp.eq.s32.totalorder %v463, 1
    %vm480 = vcmp.eq.s32.totalorder %v464, 1
    %vm481 = vcmp.eq.s32.totalorder %v465, 1
    %vm482 = vcmp.eq.s32.totalorder %v466, 1
    %vm483 = vcmp.eq.s32.totalorder %v467, 1
    %vm484 = vcmp.eq.s32.totalorder %v468, 1
    %vm485 = vcmp.eq.s32.totalorder %v469, 1
    %vm486 = vcmp.eq.s32.totalorder %v470, 1
    %vm487 = vcmp.eq.s32.totalorder %v471, 1
    %vm488 = vcmp.eq.s32.totalorder %v472, 1
    %v489 = vsel %vm473, 0.0, %v455
    %v490 = vsel %vm474, 0.0, %v454
    %v491 = vsel %vm475, 0.0, %v453
    %v492 = vsel %vm476, 0.0, %v452
    %v493 = vsel %vm477, 0.0, %v451
    %v494 = vsel %vm478, 0.0, %v450
    %v495 = vsel %vm479, 0.0, %v449
    %v496 = vsel %vm480, 0.0, %v448
    %v497 = vsel %vm481, 0.0, %v447
    %v498 = vsel %vm482, 0.0, %v446
    %v499 = vsel %vm483, 0.0, %v445
    %v500 = vsel %vm484, 0.0, %v444
    %v501 = vsel %vm485, 0.0, %v443
    %v502 = vsel %vm486, 0.0, %v442
    %v503 = vsel %vm487, 0.0, %v441
    %v504 = vsel %vm488, 0.0, %v456
    %521 = vrot.lane.b32.xlu0 %v54, 16
    %v522 = vpop.permute.xlu0 %521
    %523 = vrot.lane.b32.xlu0 %v55, 16
    %v524 = vpop.permute.xlu0 %523
    %525 = vrot.lane.b32.xlu0 %v56, 16
    %v526 = vpop.permute.xlu0 %525
    %527 = vrot.lane.b32.xlu0 %v57, 16
    %v528 = vpop.permute.xlu0 %527
    %529 = vrot.lane.b32.xlu0 %v58, 16
    %v530 = vpop.permute.xlu0 %529
    %531 = vrot.lane.b32.xlu0 %v59, 16
    %v532 = vpop.permute.xlu0 %531
    %533 = vrot.lane.b32.xlu0 %v60, 16
    %v534 = vpop.permute.xlu0 %533
    %535 = vrot.lane.b32.xlu0 %v61, 16
    %v536 = vpop.permute.xlu0 %535
    %537 = vrot.lane.b32.xlu0 %v86, 16
    %v538 = vpop.permute.xlu0 %537
    %539 = vrot.lane.b32.xlu0 %v87, 16
    %v540 = vpop.permute.xlu0 %539
    %541 = vrot.lane.b32.xlu0 %v88, 16
    %v542 = vpop.permute.xlu0 %541
    %543 = vrot.lane.b32.xlu0 %v89, 16
    %v544 = vpop.permute.xlu0 %543
    %545 = vrot.lane.b32.xlu0 %v90, 16
    %v546 = vpop.permute.xlu0 %545
    %547 = vrot.lane.b32.xlu0 %v91, 16
    %v548 = vpop.permute.xlu0 %547
    %549 = vrot.lane.b32.xlu0 %v92, 16
    %v550 = vpop.permute.xlu0 %549
    %551 = vrot.lane.b32.xlu0 %v93, 16
    %v552 = vpop.permute.xlu0 %551
    %585 = vrot.lane.b32.xlu0 %v489, 32
    %v586 = vpop.permute.xlu0 %585
    %587 = vrot.lane.b32.xlu0 %v490, 32
    %v588 = vpop.permute.xlu0 %587
    %589 = vrot.lane.b32.xlu0 %v491, 32
    %v590 = vpop.permute.xlu0 %589
    %591 = vrot.lane.b32.xlu0 %v492, 32
    %v592 = vpop.permute.xlu0 %591
    %593 = vrot.lane.b32.xlu0 %v493, 32
    %v594 = vpop.permute.xlu0 %593
    %595 = vrot.lane.b32.xlu0 %v494, 32
    %v596 = vpop.permute.xlu0 %595
    %597 = vrot.lane.b32.xlu0 %v495, 32
    %v598 = vpop.permute.xlu0 %597
    %599 = vrot.lane.b32.xlu0 %v496, 32
    %v600 = vpop.permute.xlu0 %599
    %601 = vrot.lane.b32.xlu0 %v497, 32
    %v602 = vpop.permute.xlu0 %601
    %603 = vrot.lane.b32.xlu0 %v498, 32
    %v604 = vpop.permute.xlu0 %603
    %605 = vrot.lane.b32.xlu0 %v499, 32
    %v606 = vpop.permute.xlu0 %605
    %607 = vrot.lane.b32.xlu0 %v500, 32
    %v608 = vpop.permute.xlu0 %607
    %609 = vrot.lane.b32.xlu0 %v501, 32
    %v610 = vpop.permute.xlu0 %609
    %611 = vrot.lane.b32.xlu0 %v502, 32
    %v612 = vpop.permute.xlu0 %611
    %613 = vrot.lane.b32.xlu0 %v503, 32
    %v614 = vpop.permute.xlu0 %613
    %615 = vrot.lane.b32.xlu0 %v504, 32
    %v616 = vpop.permute.xlu0 %615
    %vm633 = vcmask 130048
    %v634 = vsel %vm633, %v408, %v522
    %v635 = vsel %vm633, %v409, %v524
    %v636 = vsel %vm633, %v410, %v526
    %v637 = vsel %vm633, %v411, %v528
    %v638 = vsel %vm633, %v412, %v530
    %v639 = vsel %vm633, %v413, %v532
    %v640 = vsel %vm633, %v414, %v534
    %v641 = vsel %vm633, %v415, %v536
    %v642 = vsel %vm633, %v416, %v538
    %v643 = vsel %vm633, %v417, %v540
    %v644 = vsel %vm633, %v418, %v542
    %v645 = vsel %vm633, %v419, %v544
    %v646 = vsel %vm633, %v420, %v546
    %v647 = vsel %vm633, %v421, %v548
    %v648 = vsel %vm633, %v422, %v550
    %v649 = vsel %vm633, %v423, %v552
    %vm650 = vcmask 261120
    %v651 = vsel %vm650, %v634, %v586
    %v652 = vsel %vm650, %v635, %v588
    %v653 = vsel %vm650, %v636, %v590
    %v654 = vsel %vm650, %v637, %v592
    %v655 = vsel %vm650, %v638, %v594
    %v656 = vsel %vm650, %v639, %v596
    %v657 = vsel %vm650, %v640, %v598
    %v658 = vsel %vm650, %v641, %v600
    %v659 = vsel %vm650, %v642, %v602
    %v660 = vsel %vm650, %v643, %v604
    %v661 = vsel %vm650, %v644, %v606
    %v662 = vsel %vm650, %v645, %v608
    %v663 = vsel %vm650, %v646, %v610
    %v664 = vsel %vm650, %v647, %v612
    %v665 = vsel %vm650, %v648, %v614
    %v666 = vsel %vm650, %v649, %v616
    %v667 = vpack.c.bf16 %v652, %v651
    %v668 = vpack.c.bf16 %v654, %v653
    %v669 = vpack.c.bf16 %v656, %v655
    %v670 = vpack.c.bf16 %v658, %v657
    %v671 = vpack.c.bf16 %v660, %v659
    %v672 = vpack.c.bf16 %v662, %v661
    %v673 = vpack.c.bf16 %v664, %v663
    %v674 = vpack.c.bf16 %v666, %v665
    %v675 = vld [vmem:[%s1] sm:$0xf]
    %v676 = vld [vmem:[%s1 + $0x4] sm:$0xf]
    %v677 = vld [vmem:[%s1 + $0x8] sm:$0xf]
    %v678 = vld [vmem:[%s1 + $0xc] sm:$0xf]
    %v679 = vld [vmem:[%s1 + $0x10] sm:$0xf]
    %v680 = vld [vmem:[%s1 + $0x14] sm:$0xf]
    %v681 = vld [vmem:[%s2] sm:$0x1]
    %v683 = vlaneseq
    %v684 = vshrl.u32 %v683, 7
    %v685 = vsub.s32 0, %v684
    %v686 = vrot.slane %v681, %v685
    %v694 = vunpack.c.l.b16 %v675
    %v695 = vunpack.c.l.b16 %v676
    %v696 = vunpack.c.l.b16 %v677
    %v697 = vunpack.c.l.b16 %v678
    %v698 = vunpack.c.l.b16 %v679
    %v699 = vunpack.c.l.b16 %v680
    %v700 = vpack.c.b16 %v695, %v694
    %v701 = vpack.c.b16 %v697, %v696
    %v702 = vpack.c.b16 %v699, %v698
    %vm706 = vcmask 392192
    %v708 = vsel %vm706, %v667, 0
    %v711 = vsel %vm706, %v668, 0
    %v714 = vsel %vm706, %v669, 0
    %v717 = vsel %vm706, %v670, 0
    %v720 = vsel %vm706, %v671, 0
    %v723 = vsel %vm706, %v672, 0
    %v726 = vsel %vm706, %v673, 0
    %v729 = vsel %vm706, %v674, 0
    %731 = vmatprep.subr.bf16.mxu0 0
    %732 = vmatpush1.bf16.msra.mxu0 0
    %733 = vmatprep.subr.bf16.mxu0 0
    %734 = vmatpush1.bf16.msra.mxu0 0
    %735 = vmatprep.subr.bf16.mxu0 0
    %736 = vmatpush1.bf16.msra.mxu0 0
    %737 = vmatprep.subr.bf16.mxu0 0
    %738 = vmatpush1.bf16.msra.mxu0 0
    %739 = vmatprep.subr.bf16.mxu0 0
    %740 = vmatpush1.bf16.msra.mxu0 0
    %741 = vmatprep.subr.bf16.mxu0 0
    %742 = vmatpush1.bf16.msra.mxu0 %v702
    %743 = vmatprep.subr.bf16.mxu0 0
    %744 = vmatpush1.bf16.msra.mxu0 %v701
    %745 = vmatprep.subr.bf16.mxu0 0
    %746 = vmatpush1.bf16.msra.mxu0 %v700
    %747 = vmatprep.subr.bf16.mxu0 0
    %748 = vmatpush2.bf16.msra.mxu0 0
    %749 = vmatprep.subr.bf16.mxu0 0
    %750 = vmatpush2.bf16.msra.mxu0 0
    %751 = vmatprep.subr.bf16.mxu0 0
    %752 = vmatpush2.bf16.msra.mxu0 0
    %753 = vmatprep.subr.bf16.mxu0 0
    %754 = vmatpush2.bf16.msra.mxu0 0
    %755 = vmatprep.subr.bf16.mxu0 0
    %756 = vmatpush2.bf16.msra.mxu0 0
    %757 = vmatprep.subr.bf16.mxu0 0
    %758 = vmatpush2.bf16.msra.mxu0 0
    %759 = vmatprep.subr.bf16.mxu0 0
    %760 = vmatpush2.bf16.msra.mxu0 0
    %761 = vmatprep.subr.bf16.mxu0 0
    %762 = vmatpush2.bf16.msra.mxu0 0
    %763 = vmatprep.mubr.bf16.mxu0 0
    %764 = vmatmul.mubr.bf16.gmra.mxu0 %v708
    %v765 = vpop.f32.mrf.mxu0
    %v766 = vadd.f32 %v686, %v765
    %v767 = vpop.f32.mrf.mxu0
    %v768 = vpop.f32.mrf.mxu0
    %v769 = vadd.f32 %v686, %v768
    %v770 = vpop.f32.mrf.mxu0
    %771 = vmatprep.mubr.bf16.mxu0 0
    %772 = vmatmul.mubr.bf16.gmra.mxu0 %v711
    %v773 = vpop.f32.mrf.mxu0
    %v774 = vadd.f32 %v686, %v773
    %v775 = vpop.f32.mrf.mxu0
    %v776 = vpop.f32.mrf.mxu0
    %v777 = vadd.f32 %v686, %v776
    %v778 = vpop.f32.mrf.mxu0
    %779 = vmatprep.mubr.bf16.mxu0 0
    %780 = vmatmul.mubr.bf16.gmra.mxu0 %v714
    %v781 = vpop.f32.mrf.mxu0
    %v782 = vadd.f32 %v686, %v781
    %v783 = vpop.f32.mrf.mxu0
    %v784 = vpop.f32.mrf.mxu0
    %v785 = vadd.f32 %v686, %v784
    %v786 = vpop.f32.mrf.mxu0
    %787 = vmatprep.mubr.bf16.mxu0 0
    %788 = vmatmul.mubr.bf16.gmra.mxu0 %v717
    %v789 = vpop.f32.mrf.mxu0
    %v790 = vadd.f32 %v686, %v789
    %v791 = vpop.f32.mrf.mxu0
    %v792 = vpop.f32.mrf.mxu0
    %v793 = vadd.f32 %v686, %v792
    %v794 = vpop.f32.mrf.mxu0
    %795 = vmatprep.mubr.bf16.mxu0 0
    %796 = vmatmul.mubr.bf16.gmra.mxu0 %v720
    %v797 = vpop.f32.mrf.mxu0
    %v798 = vadd.f32 %v686, %v797
    %v799 = vpop.f32.mrf.mxu0
    %v800 = vpop.f32.mrf.mxu0
    %v801 = vadd.f32 %v686, %v800
    %v802 = vpop.f32.mrf.mxu0
    %803 = vmatprep.mubr.bf16.mxu0 0
    %804 = vmatmul.mubr.bf16.gmra.mxu0 %v723
    %v805 = vpop.f32.mrf.mxu0
    %v806 = vadd.f32 %v686, %v805
    %v807 = vpop.f32.mrf.mxu0
    %v808 = vpop.f32.mrf.mxu0
    %v809 = vadd.f32 %v686, %v808
    %v810 = vpop.f32.mrf.mxu0
    %811 = vmatprep.mubr.bf16.mxu0 0
    %812 = vmatmul.mubr.bf16.gmra.mxu0 %v726
    %v813 = vpop.f32.mrf.mxu0
    %v814 = vadd.f32 %v686, %v813
    %v815 = vpop.f32.mrf.mxu0
    %v816 = vpop.f32.mrf.mxu0
    %v817 = vadd.f32 %v686, %v816
    %v818 = vpop.f32.mrf.mxu0
    %819 = vmatprep.mubr.bf16.mxu0 0
    %820 = vmatmul.mubr.bf16.gmra.mxu0 %v729
    %v821 = vpop.f32.mrf.mxu0
    %v822 = vadd.f32 %v686, %v821
    %v823 = vpop.f32.mrf.mxu0
    %v824 = vpop.f32.mrf.mxu0
    %v825 = vadd.f32 %v686, %v824
    %v826 = vpop.f32.mrf.mxu0
    %827 = vdwg.mxu0
    %v828 = vmax.f32 %v766, 0.0
    %v829 = vmax.f32 %v769, 0.0
    %v830 = vmax.f32 %v774, 0.0
    %v831 = vmax.f32 %v777, 0.0
    %v832 = vmax.f32 %v782, 0.0
    %v833 = vmax.f32 %v785, 0.0
    %v834 = vmax.f32 %v790, 0.0
    %v835 = vmax.f32 %v793, 0.0
    %v836 = vmax.f32 %v798, 0.0
    %v837 = vmax.f32 %v801, 0.0
    %v838 = vmax.f32 %v806, 0.0
    %v839 = vmax.f32 %v809, 0.0
    %v840 = vmax.f32 %v814, 0.0
    %v841 = vmax.f32 %v817, 0.0
    %v842 = vmax.f32 %v822, 0.0
    %v843 = vmax.f32 %v825, 0.0
    %v844 = vrot.slane %v828, 7
    %v845 = vrot.slane %v829, 7
    %v846 = vrot.slane %v830, 7
    %v847 = vrot.slane %v831, 7
    %v848 = vrot.slane %v832, 7
    %v849 = vrot.slane %v833, 7
    %v850 = vrot.slane %v834, 7
    %v851 = vrot.slane %v835, 7
    %v852 = vrot.slane %v836, 7
    %v853 = vrot.slane %v837, 7
    %v854 = vrot.slane %v838, 7
    %v855 = vrot.slane %v839, 7
    %v856 = vrot.slane %v840, 7
    %v857 = vrot.slane %v841, 7
    %v858 = vrot.slane %v842, 7
    %v859 = vrot.slane %v843, 7
    %v860 = vsel %vm359, %v858, %v859
    %v861 = vsel %vm359, %v857, %v858
    %v862 = vsel %vm359, %v856, %v857
    %v863 = vsel %vm359, %v855, %v856
    %v864 = vsel %vm359, %v854, %v855
    %v865 = vsel %vm359, %v853, %v854
    %v866 = vsel %vm359, %v852, %v853
    %v867 = vsel %vm359, %v851, %v852
    %v868 = vsel %vm359, %v850, %v851
    %v869 = vsel %vm359, %v849, %v850
    %v870 = vsel %vm359, %v848, %v849
    %v871 = vsel %vm359, %v847, %v848
    %v872 = vsel %vm359, %v846, %v847
    %v873 = vsel %vm359, %v845, %v846
    %v874 = vsel %vm359, %v844, %v845
    %v875 = vsel %vm359, %v859, %v844
    %v876 = vsel %vm392, 0.0, %v875
    %v877 = vsel %vm393, 0.0, %v874
    %v878 = vsel %vm394, 0.0, %v873
    %v879 = vsel %vm395, 0.0, %v872
    %v880 = vsel %vm396, 0.0, %v871
    %v881 = vsel %vm397, 0.0, %v870
    %v882 = vsel %vm398, 0.0, %v869
    %v883 = vsel %vm399, 0.0, %v868
    %v884 = vsel %vm400, 0.0, %v867
    %v885 = vsel %vm401, 0.0, %v866
    %v886 = vsel %vm402, 0.0, %v865
    %v887 = vsel %vm403, 0.0, %v864
    %v888 = vsel %vm404, 0.0, %v863
    %v889 = vsel %vm405, 0.0, %v862
    %v890 = vsel %vm406, 0.0, %v861
    %v891 = vsel %vm407, 0.0, %v860
    %v892 = vrot.slane %v828, 1
    %v893 = vrot.slane %v829, 1
    %v894 = vrot.slane %v830, 1
    %v895 = vrot.slane %v831, 1
    %v896 = vrot.slane %v832, 1
    %v897 = vrot.slane %v833, 1
    %v898 = vrot.slane %v834, 1
    %v899 = vrot.slane %v835, 1
    %v900 = vrot.slane %v836, 1
    %v901 = vrot.slane %v837, 1
    %v902 = vrot.slane %v838, 1
    %v903 = vrot.slane %v839, 1
    %v904 = vrot.slane %v840, 1
    %v905 = vrot.slane %v841, 1
    %v906 = vrot.slane %v842, 1
    %v907 = vrot.slane %v843, 1
    %v908 = vsel %vm440, %v906, %v907
    %v909 = vsel %vm440, %v905, %v906
    %v910 = vsel %vm440, %v904, %v905
    %v911 = vsel %vm440, %v903, %v904
    %v912 = vsel %vm440, %v902, %v903
    %v913 = vsel %vm440, %v901, %v902
    %v914 = vsel %vm440, %v900, %v901
    %v915 = vsel %vm440, %v899, %v900
    %v916 = vsel %vm440, %v898, %v899
    %v917 = vsel %vm440, %v897, %v898
    %v918 = vsel %vm440, %v896, %v897
    %v919 = vsel %vm440, %v895, %v896
    %v920 = vsel %vm440, %v894, %v895
    %v921 = vsel %vm440, %v893, %v894
    %v922 = vsel %vm440, %v892, %v893
    %v923 = vsel %vm440, %v907, %v892
    %v924 = vsel %vm473, 0.0, %v922
    %v925 = vsel %vm474, 0.0, %v921
    %v926 = vsel %vm475, 0.0, %v920
    %v927 = vsel %vm476, 0.0, %v919
    %v928 = vsel %vm477, 0.0, %v918
    %v929 = vsel %vm478, 0.0, %v917
    %v930 = vsel %vm479, 0.0, %v916
    %v931 = vsel %vm480, 0.0, %v915
    %v932 = vsel %vm481, 0.0, %v914
    %v933 = vsel %vm482, 0.0, %v913
    %v934 = vsel %vm483, 0.0, %v912
    %v935 = vsel %vm484, 0.0, %v911
    %v936 = vsel %vm485, 0.0, %v910
    %v937 = vsel %vm486, 0.0, %v909
    %v938 = vsel %vm487, 0.0, %v908
    %v939 = vsel %vm488, 0.0, %v923
    %956 = vrot.lane.b32.xlu0 %v828, 32
    %v957 = vpop.permute.xlu0 %956
    %958 = vrot.lane.b32.xlu0 %v829, 32
    %v959 = vpop.permute.xlu0 %958
    %960 = vrot.lane.b32.xlu0 %v830, 32
    %v961 = vpop.permute.xlu0 %960
    %962 = vrot.lane.b32.xlu0 %v831, 32
    %v963 = vpop.permute.xlu0 %962
    %964 = vrot.lane.b32.xlu0 %v832, 32
    %v965 = vpop.permute.xlu0 %964
    %966 = vrot.lane.b32.xlu0 %v833, 32
    %v967 = vpop.permute.xlu0 %966
    %968 = vrot.lane.b32.xlu0 %v834, 32
    %v969 = vpop.permute.xlu0 %968
    %970 = vrot.lane.b32.xlu0 %v835, 32
    %v971 = vpop.permute.xlu0 %970
    %972 = vrot.lane.b32.xlu0 %v836, 32
    %v973 = vpop.permute.xlu0 %972
    %974 = vrot.lane.b32.xlu0 %v837, 32
    %v975 = vpop.permute.xlu0 %974
    %976 = vrot.lane.b32.xlu0 %v838, 32
    %v977 = vpop.permute.xlu0 %976
    %978 = vrot.lane.b32.xlu0 %v839, 32
    %v979 = vpop.permute.xlu0 %978
    %980 = vrot.lane.b32.xlu0 %v840, 32
    %v981 = vpop.permute.xlu0 %980
    %982 = vrot.lane.b32.xlu0 %v841, 32
    %v983 = vpop.permute.xlu0 %982
    %984 = vrot.lane.b32.xlu0 %v842, 32
    %v985 = vpop.permute.xlu0 %984
    %986 = vrot.lane.b32.xlu0 %v843, 32
    %v987 = vpop.permute.xlu0 %986
    %1020 = vrot.lane.b32.xlu0 %v924, 64
    %v1021 = vpop.permute.xlu0 %1020
    %1022 = vrot.lane.b32.xlu0 %v925, 64
    %v1023 = vpop.permute.xlu0 %1022
    %1024 = vrot.lane.b32.xlu0 %v926, 64
    %v1025 = vpop.permute.xlu0 %1024
    %1026 = vrot.lane.b32.xlu0 %v927, 64
    %v1027 = vpop.permute.xlu0 %1026
    %1028 = vrot.lane.b32.xlu0 %v928, 64
    %v1029 = vpop.permute.xlu0 %1028
    %1030 = vrot.lane.b32.xlu0 %v929, 64
    %v1031 = vpop.permute.xlu0 %1030
    %1032 = vrot.lane.b32.xlu0 %v930, 64
    %v1033 = vpop.permute.xlu0 %1032
    %1034 = vrot.lane.b32.xlu0 %v931, 64
    %v1035 = vpop.permute.xlu0 %1034
    %1036 = vrot.lane.b32.xlu0 %v932, 64
    %v1037 = vpop.permute.xlu0 %1036
    %1038 = vrot.lane.b32.xlu0 %v933, 64
    %v1039 = vpop.permute.xlu0 %1038
    %1040 = vrot.lane.b32.xlu0 %v934, 64
    %v1041 = vpop.permute.xlu0 %1040
    %1042 = vrot.lane.b32.xlu0 %v935, 64
    %v1043 = vpop.permute.xlu0 %1042
    %1044 = vrot.lane.b32.xlu0 %v936, 64
    %v1045 = vpop.permute.xlu0 %1044
    %1046 = vrot.lane.b32.xlu0 %v937, 64
    %v1047 = vpop.permute.xlu0 %1046
    %1048 = vrot.lane.b32.xlu0 %v938, 64
    %v1049 = vpop.permute.xlu0 %1048
    %1050 = vrot.lane.b32.xlu0 %v939, 64
    %v1051 = vpop.permute.xlu0 %1050
    %v1068 = vsel %vm650, %v876, %v957
    %v1069 = vsel %vm650, %v877, %v959
    %v1070 = vsel %vm650, %v878, %v961
    %v1071 = vsel %vm650, %v879, %v963
    %v1072 = vsel %vm650, %v880, %v965
    %v1073 = vsel %vm650, %v881, %v967
    %v1074 = vsel %vm650, %v882, %v969
    %v1075 = vsel %vm650, %v883, %v971
    %v1076 = vsel %vm650, %v884, %v973
    %v1077 = vsel %vm650, %v885, %v975
    %v1078 = vsel %vm650, %v886, %v977
    %v1079 = vsel %vm650, %v887, %v979
    %v1080 = vsel %vm650, %v888, %v981
    %v1081 = vsel %vm650, %v889, %v983
    %v1082 = vsel %vm650, %v890, %v985
    %v1083 = vsel %vm650, %v891, %v987
    %vm1084 = vcmask 523264
    %v1085 = vsel %vm1084, %v1068, %v1021
    %v1086 = vsel %vm1084, %v1069, %v1023
    %v1087 = vsel %vm1084, %v1070, %v1025
    %v1088 = vsel %vm1084, %v1071, %v1027
    %v1089 = vsel %vm1084, %v1072, %v1029
    %v1090 = vsel %vm1084, %v1073, %v1031
    %v1091 = vsel %vm1084, %v1074, %v1033
    %v1092 = vsel %vm1084, %v1075, %v1035
    %v1093 = vsel %vm1084, %v1076, %v1037
    %v1094 = vsel %vm1084, %v1077, %v1039
    %v1095 = vsel %vm1084, %v1078, %v1041
    %v1096 = vsel %vm1084, %v1079, %v1043
    %v1097 = vsel %vm1084, %v1080, %v1045
    %v1098 = vsel %vm1084, %v1081, %v1047
    %v1099 = vsel %vm1084, %v1082, %v1049
    %v1100 = vsel %vm1084, %v1083, %v1051
    %v1101 = vpack.c.bf16 %v1086, %v1085
    %v1102 = vpack.c.bf16 %v1088, %v1087
    %v1103 = vpack.c.bf16 %v1090, %v1089
    %v1104 = vpack.c.bf16 %v1092, %v1091
    %v1105 = vpack.c.bf16 %v1094, %v1093
    %v1106 = vpack.c.bf16 %v1096, %v1095
    %v1107 = vpack.c.bf16 %v1098, %v1097
    %v1108 = vpack.c.bf16 %v1100, %v1099
    %v1109 = vld [vmem:[%s3] sm:$0xf]
    %v1110 = vld [vmem:[%s3 + $0x4] sm:$0xf]
    %v1111 = vld [vmem:[%s3 + $0x8] sm:$0xf]
    %v1112 = vld [vmem:[%s3 + $0xc] sm:$0xf]
    %v1113 = vld [vmem:[%s3 + $0x10] sm:$0xf]
    %v1114 = vld [vmem:[%s3 + $0x14] sm:$0xf]
    %v1115 = vld [vmem:[%s3 + $0x18] sm:$0xf]
    %v1116 = vld [vmem:[%s3 + $0x1c] sm:$0xf]
    %v1117 = vld [vmem:[%s3 + $0x20] sm:$0xf]
    %v1118 = vld [vmem:[%s3 + $0x24] sm:$0xf]
    %v1119 = vld [vmem:[%s3 + $0x28] sm:$0xf]
    %v1120 = vld [vmem:[%s3 + $0x2c] sm:$0xf]
    %v1121 = vld [vmem:[%s4] sm:$0x1]
    %v1123 = vlaneseq
    %v1124 = vshrl.u32 %v1123, 7
    %v1125 = vsub.s32 0, %v1124
    %v1126 = vrot.slane %v1121, %v1125
    %v1140 = vunpack.c.l.b16 %v1109
    %v1141 = vunpack.c.l.b16 %v1110
    %v1142 = vunpack.c.l.b16 %v1111
    %v1143 = vunpack.c.l.b16 %v1112
    %v1144 = vunpack.c.l.b16 %v1113
    %v1145 = vunpack.c.l.b16 %v1114
    %v1146 = vunpack.c.l.b16 %v1115
    %v1147 = vunpack.c.l.b16 %v1116
    %v1148 = vunpack.c.l.b16 %v1117
    %v1149 = vunpack.c.l.b16 %v1118
    %v1150 = vunpack.c.l.b16 %v1119
    %v1151 = vunpack.c.l.b16 %v1120
    %v1152 = vpack.c.b16 %v1141, %v1140
    %v1153 = vpack.c.b16 %v1143, %v1142
    %v1154 = vpack.c.b16 %v1145, %v1144
    %v1155 = vpack.c.b16 %v1147, %v1146
    %v1156 = vpack.c.b16 %v1149, %v1148
    %v1157 = vpack.c.b16 %v1151, %v1150
    %vm1164 = vcmask 785408
    %v1166 = vsel %vm1164, %v1101, 0
    %v1169 = vsel %vm1164, %v1102, 0
    %v1172 = vsel %vm1164, %v1103, 0
    %v1175 = vsel %vm1164, %v1104, 0
    %v1178 = vsel %vm1164, %v1105, 0
    %v1181 = vsel %vm1164, %v1106, 0
    %v1184 = vsel %vm1164, %v1107, 0
    %v1187 = vsel %vm1164, %v1108, 0
    %1189 = vmatprep.subr.bf16.mxu0 0
    %1190 = vmatpush1.bf16.msra.mxu0 0
    %1191 = vmatprep.subr.bf16.mxu0 0
    %1192 = vmatpush1.bf16.msra.mxu0 0
    %1193 = vmatprep.subr.bf16.mxu0 0
    %1194 = vmatpush1.bf16.msra.mxu0 %v1157
    %1195 = vmatprep.subr.bf16.mxu0 0
    %1196 = vmatpush1.bf16.msra.mxu0 %v1156
    %1197 = vmatprep.subr.bf16.mxu0 0
    %1198 = vmatpush1.bf16.msra.mxu0 %v1155
    %1199 = vmatprep.subr.bf16.mxu0 0
    %1200 = vmatpush1.bf16.msra.mxu0 %v1154
    %1201 = vmatprep.subr.bf16.mxu0 0
    %1202 = vmatpush1.bf16.msra.mxu0 %v1153
    %1203 = vmatprep.subr.bf16.mxu0 0
    %1204 = vmatpush1.bf16.msra.mxu0 %v1152
    %1205 = vmatprep.subr.bf16.mxu0 0
    %1206 = vmatpush2.bf16.msra.mxu0 0
    %1207 = vmatprep.subr.bf16.mxu0 0
    %1208 = vmatpush2.bf16.msra.mxu0 0
    %1209 = vmatprep.subr.bf16.mxu0 0
    %1210 = vmatpush2.bf16.msra.mxu0 0
    %1211 = vmatprep.subr.bf16.mxu0 0
    %1212 = vmatpush2.bf16.msra.mxu0 0
    %1213 = vmatprep.subr.bf16.mxu0 0
    %1214 = vmatpush2.bf16.msra.mxu0 0
    %1215 = vmatprep.subr.bf16.mxu0 0
    %1216 = vmatpush2.bf16.msra.mxu0 0
    %1217 = vmatprep.subr.bf16.mxu0 0
    %1218 = vmatpush2.bf16.msra.mxu0 0
    %1219 = vmatprep.subr.bf16.mxu0 0
    %1220 = vmatpush2.bf16.msra.mxu0 0
    %1221 = vmatprep.mubr.bf16.mxu0 0
    %1222 = vmatmul.mubr.bf16.gmra.mxu0 %v1166
    %v1223 = vpop.f32.mrf.mxu0
    %v1224 = vadd.f32 %v1126, %v1223
    %v1225 = vpop.f32.mrf.mxu0
    %v1226 = vpop.f32.mrf.mxu0
    %v1227 = vadd.f32 %v1126, %v1226
    %v1228 = vpop.f32.mrf.mxu0
    %1229 = vmatprep.mubr.bf16.mxu0 0
    %1230 = vmatmul.mubr.bf16.gmra.mxu0 %v1169
    %v1231 = vpop.f32.mrf.mxu0
    %v1232 = vadd.f32 %v1126, %v1231
    %v1233 = vpop.f32.mrf.mxu0
    %v1234 = vpop.f32.mrf.mxu0
    %v1235 = vadd.f32 %v1126, %v1234
    %v1236 = vpop.f32.mrf.mxu0
    %1237 = vmatprep.mubr.bf16.mxu0 0
    %1238 = vmatmul.mubr.bf16.gmra.mxu0 %v1172
    %v1239 = vpop.f32.mrf.mxu0
    %v1240 = vadd.f32 %v1126, %v1239
    %v1241 = vpop.f32.mrf.mxu0
    %v1242 = vpop.f32.mrf.mxu0
    %v1243 = vadd.f32 %v1126, %v1242
    %v1244 = vpop.f32.mrf.mxu0
    %1245 = vmatprep.mubr.bf16.mxu0 0
    %1246 = vmatmul.mubr.bf16.gmra.mxu0 %v1175
    %v1247 = vpop.f32.mrf.mxu0
    %v1248 = vadd.f32 %v1126, %v1247
    %v1249 = vpop.f32.mrf.mxu0
    %v1250 = vpop.f32.mrf.mxu0
    %v1251 = vadd.f32 %v1126, %v1250
    %v1252 = vpop.f32.mrf.mxu0
    %1253 = vmatprep.mubr.bf16.mxu0 0
    %1254 = vmatmul.mubr.bf16.gmra.mxu0 %v1178
    %v1255 = vpop.f32.mrf.mxu0
    %v1256 = vadd.f32 %v1126, %v1255
    %v1257 = vpop.f32.mrf.mxu0
    %v1258 = vpop.f32.mrf.mxu0
    %v1259 = vadd.f32 %v1126, %v1258
    %v1260 = vpop.f32.mrf.mxu0
    %1261 = vmatprep.mubr.bf16.mxu0 0
    %1262 = vmatmul.mubr.bf16.gmra.mxu0 %v1181
    %v1263 = vpop.f32.mrf.mxu0
    %v1264 = vadd.f32 %v1126, %v1263
    %v1265 = vpop.f32.mrf.mxu0
    %v1266 = vpop.f32.mrf.mxu0
    %v1267 = vadd.f32 %v1126, %v1266
    %v1268 = vpop.f32.mrf.mxu0
    %1269 = vmatprep.mubr.bf16.mxu0 0
    %1270 = vmatmul.mubr.bf16.gmra.mxu0 %v1184
    %v1271 = vpop.f32.mrf.mxu0
    %v1272 = vadd.f32 %v1126, %v1271
    %v1273 = vpop.f32.mrf.mxu0
    %v1274 = vpop.f32.mrf.mxu0
    %v1275 = vadd.f32 %v1126, %v1274
    %v1276 = vpop.f32.mrf.mxu0
    %1277 = vmatprep.mubr.bf16.mxu0 0
    %1278 = vmatmul.mubr.bf16.gmra.mxu0 %v1187
    %v1279 = vpop.f32.mrf.mxu0
    %v1280 = vadd.f32 %v1126, %v1279
    %v1281 = vpop.f32.mrf.mxu0
    %v1282 = vpop.f32.mrf.mxu0
    %v1283 = vadd.f32 %v1126, %v1282
    %v1284 = vpop.f32.mrf.mxu0
    %1285 = vdwg.mxu0
    %v1286 = vsel %vm650, %v1224, 0.0
    %v1287 = vsel %vm650, %v1227, 0.0
    %v1288 = vadd.f32 %v1286, %v1287
    %v1289 = vsel %vm650, %v1232, 0.0
    %v1290 = vadd.f32 %v1288, %v1289
    %v1291 = vsel %vm650, %v1235, 0.0
    %v1292 = vadd.f32 %v1290, %v1291
    %v1293 = vsel %vm650, %v1240, 0.0
    %v1294 = vadd.f32 %v1292, %v1293
    %v1295 = vsel %vm650, %v1243, 0.0
    %v1296 = vadd.f32 %v1294, %v1295
    %v1297 = vsel %vm650, %v1248, 0.0
    %v1298 = vadd.f32 %v1296, %v1297
    %v1299 = vsel %vm650, %v1251, 0.0
    %v1300 = vadd.f32 %v1298, %v1299
    %v1301 = vrot.slane %v1300, 4
    %v1302 = vadd.f32 %v1300, %v1301
    %v1303 = vrot.slane %v1302, 2
    %v1304 = vadd.f32 %v1302, %v1303
    %v1305 = vrot.slane %v1304, 1
    %v1306 = vadd.f32 %v1304, %v1305
    %v1307 = vsel %vm650, %v1256, 0.0
    %v1308 = vsel %vm650, %v1259, 0.0
    %v1309 = vadd.f32 %v1307, %v1308
    %v1310 = vsel %vm650, %v1264, 0.0
    %v1311 = vadd.f32 %v1309, %v1310
    %v1312 = vsel %vm650, %v1267, 0.0
    %v1313 = vadd.f32 %v1311, %v1312
    %v1314 = vsel %vm650, %v1272, 0.0
    %v1315 = vadd.f32 %v1313, %v1314
    %v1316 = vsel %vm650, %v1275, 0.0
    %v1317 = vadd.f32 %v1315, %v1316
    %v1318 = vsel %vm650, %v1280, 0.0
    %v1319 = vadd.f32 %v1317, %v1318
    %v1320 = vsel %vm650, %v1283, 0.0
    %v1321 = vadd.f32 %v1319, %v1320
    %v1322 = vrot.slane %v1321, 4
    %v1323 = vadd.f32 %v1321, %v1322
    %v1324 = vrot.slane %v1323, 2
    %v1325 = vadd.f32 %v1323, %v1324
    %v1326 = vrot.slane %v1325, 1
    %v1327 = vadd.f32 %v1325, %v1326
    %v1328 = vrcp.pop 64.0
    %v1329 = vmul.f32 %v1306, %v1328
    %v1330 = vmul.f32 %v1327, %v1328
    %v1331 = vld [vmem:[%s5] sm:$0xff]
    %v1332 = vld [vmem:[%s5 + $0x8] sm:$0xff]
    %v1333 = vld [vmem:[%s5 + $0x10] sm:$0xff]
    %v1334 = vld [vmem:[%s5 + $0x18] sm:$0xff]
    %vm1337 = vcmask 1041409
    %v1338 = vsel %vm1337, %v1330, %v1329
    %v1339 = vsel %vm650, %v1338, 0
    %1341 = vmatprep.subr.mxu0 0.0
    %1342 = vmatpush1.msra.mxu0 0.0
    %1343 = vmatprep.subr.mxu0 0.0
    %1344 = vmatpush1.msra.mxu0 0.0
    %1345 = vmatprep.subr.mxu0 0.0
    %1346 = vmatpush1.msra.mxu0 0.0
    %1347 = vmatprep.subr.mxu0 0.0
    %1348 = vmatpush1.msra.mxu0 0.0
    %1349 = vmatprep.subr.mxu0 0.0
    %1350 = vmatpush1.msra.mxu0 0.0
    %1351 = vmatprep.subr.mxu0 0.0
    %1352 = vmatpush1.msra.mxu0 0.0
    %1353 = vmatprep.subr.mxu0 0.0
    %1354 = vmatpush1.msra.mxu0 0.0
    %1355 = vmatprep.subr.mxu0 0.0
    %1356 = vmatpush1.msra.mxu0 0.0
    %1357 = vmatprep.subr.mxu0 0.0
    %1358 = vmatpush1.msra.mxu0 0.0
    %1359 = vmatprep.subr.mxu0 0.0
    %1360 = vmatpush1.msra.mxu0 0.0
    %1361 = vmatprep.subr.mxu0 0.0
    %1362 = vmatpush1.msra.mxu0 0.0
    %1363 = vmatprep.subr.mxu0 0.0
    %1364 = vmatpush1.msra.mxu0 0.0
    %1365 = vmatprep.subr.mxu0 0.0
    %1366 = vmatpush1.msra.mxu0 %v1334
    %1367 = vmatprep.subr.mxu0 0.0
    %1368 = vmatpush1.msra.mxu0 %v1333
    %1369 = vmatprep.subr.mxu0 0.0
    %1370 = vmatpush1.msra.mxu0 %v1332
    %1371 = vmatprep.subr.mxu0 0.0
    %1372 = vmatpush1.msra.mxu0 %v1331
    %1373 = vmatprep.subr.mxu0 0.0
    %1374 = vmatpush2.msra.mxu0 0.0
    %1375 = vmatprep.subr.mxu0 0.0
    %1376 = vmatpush2.msra.mxu0 0.0
    %1377 = vmatprep.subr.mxu0 0.0
    %1378 = vmatpush2.msra.mxu0 0.0
    %1379 = vmatprep.subr.mxu0 0.0
    %1380 = vmatpush2.msra.mxu0 0.0
    %1381 = vmatprep.subr.mxu0 0.0
    %1382 = vmatpush2.msra.mxu0 0.0
    %1383 = vmatprep.subr.mxu0 0.0
    %1384 = vmatpush2.msra.mxu0 0.0
    %1385 = vmatprep.subr.mxu0 0.0
    %1386 = vmatpush2.msra.mxu0 0.0
    %1387 = vmatprep.subr.mxu0 0.0
    %1388 = vmatpush2.msra.mxu0 0.0
    %1389 = vmatprep.subr.mxu0 0.0
    %1390 = vmatpush2.msra.mxu0 0.0
    %1391 = vmatprep.subr.mxu0 0.0
    %1392 = vmatpush2.msra.mxu0 0.0
    %1393 = vmatprep.subr.mxu0 0.0
    %1394 = vmatpush2.msra.mxu0 0.0
    %1395 = vmatprep.subr.mxu0 0.0
    %1396 = vmatpush2.msra.mxu0 0.0
    %1397 = vmatprep.subr.mxu0 0.0
    %1398 = vmatpush2.msra.mxu0 0.0
    %1399 = vmatprep.subr.mxu0 0.0
    %1400 = vmatpush2.msra.mxu0 0.0
    %1401 = vmatprep.subr.mxu0 0.0
    %1402 = vmatpush2.msra.mxu0 0.0
    %1403 = vmatprep.subr.mxu0 0.0
    %1404 = vmatpush2.msra.mxu0 0.0
    %1405 = vmatprep.mubr.f32.mxu0 0.0
    %1406 = vmatmul.mubr.f32.gmra.mxu0 %v1339
    %v1407 = vpop.f32.mrf.mxu0
    %v1408 = vadd.f32 0.0, %v1407
    %v1409 = vpop.f32.mrf.mxu0
    %1410 = vdwg.mxu0
    %v1411 = vmax.f32 %v1408, 0.0
    %v1412 = vld [vmem:[%s6] sm:$0x3]
    %vm1413 = vcmask 15360
    %v1415 = vsel %vm1413, %v1411, 0
    %vm1417 = vcmask 1041408
    %v1419 = vsel %vm1417, %v1412, 0
    %1421 = vmatprep.subr.mxu0 0.0
    %1422 = vmatpush1.msra.mxu0 0.0
    %1423 = vmatprep.subr.mxu0 0.0
    %1424 = vmatpush1.msra.mxu0 0.0
    %1425 = vmatprep.subr.mxu0 0.0
    %1426 = vmatpush1.msra.mxu0 0.0
    %1427 = vmatprep.subr.mxu0 0.0
    %1428 = vmatpush1.msra.mxu0 0.0
    %1429 = vmatprep.subr.mxu0 0.0
    %1430 = vmatpush1.msra.mxu0 0.0
    %1431 = vmatprep.subr.mxu0 0.0
    %1432 = vmatpush1.msra.mxu0 0.0
    %1433 = vmatprep.subr.mxu0 0.0
    %1434 = vmatpush1.msra.mxu0 0.0
    %1435 = vmatprep.subr.mxu0 0.0
    %1436 = vmatpush1.msra.mxu0 0.0
    %1437 = vmatprep.subr.mxu0 0.0
    %1438 = vmatpush1.msra.mxu0 0.0
    %1439 = vmatprep.subr.mxu0 0.0
    %1440 = vmatpush1.msra.mxu0 0.0
    %1441 = vmatprep.subr.mxu0 0.0
    %1442 = vmatpush1.msra.mxu0 0.0
    %1443 = vmatprep.subr.mxu0 0.0
    %1444 = vmatpush1.msra.mxu0 0.0
    %1445 = vmatprep.subr.mxu0 0.0
    %1446 = vmatpush1.msra.mxu0 0.0
    %1447 = vmatprep.subr.mxu0 0.0
    %1448 = vmatpush1.msra.mxu0 0.0
    %1449 = vmatprep.subr.mxu0 0.0
    %1450 = vmatpush1.msra.mxu0 0.0
    %1451 = vmatprep.subr.mxu0 0.0
    %1452 = vmatpush1.msra.mxu0 %v1419
    %1453 = vmatprep.subr.mxu0 0.0
    %1454 = vmatpush2.msra.mxu0 0.0
    %1455 = vmatprep.subr.mxu0 0.0
    %1456 = vmatpush2.msra.mxu0 0.0
    %1457 = vmatprep.subr.mxu0 0.0
    %1458 = vmatpush2.msra.mxu0 0.0
    %1459 = vmatprep.subr.mxu0 0.0
    %1460 = vmatpush2.msra.mxu0 0.0
    %1461 = vmatprep.subr.mxu0 0.0
    %1462 = vmatpush2.msra.mxu0 0.0
    %1463 = vmatprep.subr.mxu0 0.0
    %1464 = vmatpush2.msra.mxu0 0.0
    %1465 = vmatprep.subr.mxu0 0.0
    %1466 = vmatpush2.msra.mxu0 0.0
    %1467 = vmatprep.subr.mxu0 0.0
    %1468 = vmatpush2.msra.mxu0 0.0
    %1469 = vmatprep.subr.mxu0 0.0
    %1470 = vmatpush2.msra.mxu0 0.0
    %1471 = vmatprep.subr.mxu0 0.0
    %1472 = vmatpush2.msra.mxu0 0.0
    %1473 = vmatprep.subr.mxu0 0.0
    %1474 = vmatpush2.msra.mxu0 0.0
    %1475 = vmatprep.subr.mxu0 0.0
    %1476 = vmatpush2.msra.mxu0 0.0
    %1477 = vmatprep.subr.mxu0 0.0
    %1478 = vmatpush2.msra.mxu0 0.0
    %1479 = vmatprep.subr.mxu0 0.0
    %1480 = vmatpush2.msra.mxu0 0.0
    %1481 = vmatprep.subr.mxu0 0.0
    %1482 = vmatpush2.msra.mxu0 0.0
    %1483 = vmatprep.subr.mxu0 0.0
    %1484 = vmatpush2.msra.mxu0 0.0
    %1485 = vmatprep.mubr.f32.mxu0 0.0
    %1486 = vmatmul.mubr.f32.gmra.mxu0 %v1415
    %v1487 = vpop.f32.mrf.mxu0
    %v1488 = vadd.f32 0.0, %v1487
    %v1489 = vpop.f32.mrf.mxu0
    %1490 = vdwg.mxu0
    %v1491 = vxor.u32 %v1488, 2147483648
    %v1492 = vmul.f32 %v1491, 1.442695
    %v1493 = vpow.pop %v1492
    %v1494 = vadd.f32 %v1493, 1.0
    %v1495 = vrcp.pop %v1494
    %v1496 = vmul.f32 1.0, %v1495
    %v1499 = vunpack.c.l.s4 1966171168
    %v1500 = vunpack.c.0.s8 %v1499
    %v1501 = vlaneseq
    %v1502 = vshrl.u32 %v1501, 7
    %v1503 = vsub.s32 %v1500, %v1502
    %v1504 = vrot.slane %v1496, %v1503
    %v1505 = vcombine.high %v1504, %v1504
    %v1507 = vunpack.c.l.s4 1966171168
    %v1508 = vunpack.c.0.s8 %v1507
    %v1509 = vlaneseq
    %v1510 = vshrl.u32 %v1509, 7
    %v1511 = vsub.s32 %v1508, %v1510
    %v1512 = vrot.slane %v1504, %v1511
    %v1514 = vunpack.c.l.s4 1966171168
    %v1515 = vunpack.c.0.s8 %v1514
    %v1516 = vlaneseq
    %v1517 = vshrl.u32 %v1516, 7
    %v1518 = vsub.s32 %v1515, %v1517
    %v1519 = vrot.slane %v1505, %v1518
    %v1520 = vlaneseq
    %v1521 = vshrl.u32 %v1520, 7
    %v1522 = vsub.s32 0, %v1521
    %v1523 = vrot.slane %v1512, %v1522
    %v1524 = vlaneseq
    %v1525 = vshrl.u32 %v1524, 7
    %v1526 = vsub.s32 0, %v1525
    %v1527 = vrot.slane %v1519, %v1526
    %v1530 = vmul.f32 %v1224, %v1523
    %v1531 = vmul.f32 %v1227, %v1523
    %v1532 = vmul.f32 %v1232, %v1523
    %v1533 = vmul.f32 %v1235, %v1523
    %v1534 = vmul.f32 %v1240, %v1523
    %v1535 = vmul.f32 %v1243, %v1523
    %v1536 = vmul.f32 %v1248, %v1523
    %v1537 = vmul.f32 %v1251, %v1523
    %v1538 = vmul.f32 %v1256, %v1527
    %v1539 = vmul.f32 %v1259, %v1527
    %v1540 = vmul.f32 %v1264, %v1527
    %v1541 = vmul.f32 %v1267, %v1527
    %v1542 = vmul.f32 %v1272, %v1527
    %v1543 = vmul.f32 %v1275, %v1527
    %v1544 = vmul.f32 %v1280, %v1527
    %v1545 = vmul.f32 %v1283, %v1527
    %v1546 = vpack.c.bf16 %v55, %v54
    %v1547 = vpack.c.bf16 %v57, %v56
    %v1548 = vpack.c.bf16 %v59, %v58
    %v1549 = vpack.c.bf16 %v61, %v60
    %v1550 = vpack.c.bf16 %v87, %v86
    %v1551 = vpack.c.bf16 %v89, %v88
    %v1552 = vpack.c.bf16 %v91, %v90
    %v1553 = vpack.c.bf16 %v93, %v92
    %v1554 = vld [vmem:[%s7] sm:$0xf]
    %v1555 = vld [vmem:[%s7 + $0x4] sm:$0xf]
    %v1556 = vld [vmem:[%s8] sm:$0x1]
    %v1558 = vlaneseq
    %v1559 = vshrl.u32 %v1558, 7
    %v1560 = vsub.s32 0, %v1559
    %v1561 = vrot.slane %v1556, %v1560
    %v1565 = vunpack.c.l.b16 %v1554
    %v1566 = vunpack.c.l.b16 %v1555
    %v1567 = vpack.c.b16 %v1566, %v1565
    %v1570 = vsel %vm633, %v1546, 0
    %v1573 = vsel %vm633, %v1547, 0
    %v1576 = vsel %vm633, %v1548, 0
    %v1579 = vsel %vm633, %v1549, 0
    %v1582 = vsel %vm633, %v1550, 0
    %v1585 = vsel %vm633, %v1551, 0
    %v1588 = vsel %vm633, %v1552, 0
    %v1591 = vsel %vm633, %v1553, 0
    %1593 = vmatprep.subr.bf16.mxu0 0
    %1594 = vmatpush1.bf16.msra.mxu0 0
    %1595 = vmatprep.subr.bf16.mxu0 0
    %1596 = vmatpush1.bf16.msra.mxu0 0
    %1597 = vmatprep.subr.bf16.mxu0 0
    %1598 = vmatpush1.bf16.msra.mxu0 0
    %1599 = vmatprep.subr.bf16.mxu0 0
    %1600 = vmatpush1.bf16.msra.mxu0 0
    %1601 = vmatprep.subr.bf16.mxu0 0
    %1602 = vmatpush1.bf16.msra.mxu0 0
    %1603 = vmatprep.subr.bf16.mxu0 0
    %1604 = vmatpush1.bf16.msra.mxu0 0
    %1605 = vmatprep.subr.bf16.mxu0 0
    %1606 = vmatpush1.bf16.msra.mxu0 0
    %1607 = vmatprep.subr.bf16.mxu0 0
    %1608 = vmatpush1.bf16.msra.mxu0 %v1567
    %1609 = vmatprep.subr.bf16.mxu0 0
    %1610 = vmatpush2.bf16.msra.mxu0 0
    %1611 = vmatprep.subr.bf16.mxu0 0
    %1612 = vmatpush2.bf16.msra.mxu0 0
    %1613 = vmatprep.subr.bf16.mxu0 0
    %1614 = vmatpush2.bf16.msra.mxu0 0
    %1615 = vmatprep.subr.bf16.mxu0 0
    %1616 = vmatpush2.bf16.msra.mxu0 0
    %1617 = vmatprep.subr.bf16.mxu0 0
    %1618 = vmatpush2.bf16.msra.mxu0 0
    %1619 = vmatprep.subr.bf16.mxu0 0
    %1620 = vmatpush2.bf16.msra.mxu0 0
    %1621 = vmatprep.subr.bf16.mxu0 0
    %1622 = vmatpush2.bf16.msra.mxu0 0
    %1623 = vmatprep.subr.bf16.mxu0 0
    %1624 = vmatpush2.bf16.msra.mxu0 0
    %1625 = vmatprep.mubr.bf16.mxu0 0
    %1626 = vmatmul.mubr.bf16.gmra.mxu0 %v1570
    %v1627 = vpop.f32.mrf.mxu0
    %v1628 = vadd.f32 %v1561, %v1627
    %v1629 = vpop.f32.mrf.mxu0
    %v1630 = vpop.f32.mrf.mxu0
    %v1631 = vadd.f32 %v1561, %v1630
    %v1632 = vpop.f32.mrf.mxu0
    %1633 = vmatprep.mubr.bf16.mxu0 0
    %1634 = vmatmul.mubr.bf16.gmra.mxu0 %v1573
    %v1635 = vpop.f32.mrf.mxu0
    %v1636 = vadd.f32 %v1561, %v1635
    %v1637 = vpop.f32.mrf.mxu0
    %v1638 = vpop.f32.mrf.mxu0
    %v1639 = vadd.f32 %v1561, %v1638
    %v1640 = vpop.f32.mrf.mxu0
    %1641 = vmatprep.mubr.bf16.mxu0 0
    %1642 = vmatmul.mubr.bf16.gmra.mxu0 %v1576
    %v1643 = vpop.f32.mrf.mxu0
    %v1644 = vadd.f32 %v1561, %v1643
    %v1645 = vpop.f32.mrf.mxu0
    %v1646 = vpop.f32.mrf.mxu0
    %v1647 = vadd.f32 %v1561, %v1646
    %v1648 = vpop.f32.mrf.mxu0
    %1649 = vmatprep.mubr.bf16.mxu0 0
    %1650 = vmatmul.mubr.bf16.gmra.mxu0 %v1579
    %v1651 = vpop.f32.mrf.mxu0
    %v1652 = vadd.f32 %v1561, %v1651
    %v1653 = vpop.f32.mrf.mxu0
    %v1654 = vpop.f32.mrf.mxu0
    %v1655 = vadd.f32 %v1561, %v1654
    %v1656 = vpop.f32.mrf.mxu0
    %1657 = vmatprep.mubr.bf16.mxu0 0
    %1658 = vmatmul.mubr.bf16.gmra.mxu0 %v1582
    %v1659 = vpop.f32.mrf.mxu0
    %v1660 = vadd.f32 %v1561, %v1659
    %v1661 = vpop.f32.mrf.mxu0
    %v1662 = vpop.f32.mrf.mxu0
    %v1663 = vadd.f32 %v1561, %v1662
    %v1664 = vpop.f32.mrf.mxu0
    %1665 = vmatprep.mubr.bf16.mxu0 0
    %1666 = vmatmul.mubr.bf16.gmra.mxu0 %v1585
    %v1667 = vpop.f32.mrf.mxu0
    %v1668 = vadd.f32 %v1561, %v1667
    %v1669 = vpop.f32.mrf.mxu0
    %v1670 = vpop.f32.mrf.mxu0
    %v1671 = vadd.f32 %v1561, %v1670
    %v1672 = vpop.f32.mrf.mxu0
    %1673 = vmatprep.mubr.bf16.mxu0 0
    %1674 = vmatmul.mubr.bf16.gmra.mxu0 %v1588
    %v1675 = vpop.f32.mrf.mxu0
    %v1676 = vadd.f32 %v1561, %v1675
    %v1677 = vpop.f32.mrf.mxu0
    %v1678 = vpop.f32.mrf.mxu0
    %v1679 = vadd.f32 %v1561, %v1678
    %v1680 = vpop.f32.mrf.mxu0
    %1681 = vmatprep.mubr.bf16.mxu0 0
    %1682 = vmatmul.mubr.bf16.gmra.mxu0 %v1591
    %v1683 = vpop.f32.mrf.mxu0
    %v1684 = vadd.f32 %v1561, %v1683
    %v1685 = vpop.f32.mrf.mxu0
    %v1686 = vpop.f32.mrf.mxu0
    %v1687 = vadd.f32 %v1561, %v1686
    %v1688 = vpop.f32.mrf.mxu0
    %1689 = vdwg.mxu0
    %v1690 = vadd.f32 %v1530, %v1628
    %v1691 = vadd.f32 %v1531, %v1631
    %v1692 = vadd.f32 %v1532, %v1636
    %v1693 = vadd.f32 %v1533, %v1639
    %v1694 = vadd.f32 %v1534, %v1644
    %v1695 = vadd.f32 %v1535, %v1647
    %v1696 = vadd.f32 %v1536, %v1652
    %v1697 = vadd.f32 %v1537, %v1655
    %v1698 = vadd.f32 %v1538, %v1660
    %v1699 = vadd.f32 %v1539, %v1663
    %v1700 = vadd.f32 %v1540, %v1668
    %v1701 = vadd.f32 %v1541, %v1671
    %v1702 = vadd.f32 %v1542, %v1676
    %v1703 = vadd.f32 %v1543, %v1679
    %v1704 = vadd.f32 %v1544, %v1684
    %v1705 = vadd.f32 %v1545, %v1687
    %v1706 = vmax.f32 %v1690, 0.0
    %v1707 = vmax.f32 %v1691, 0.0
    %v1708 = vmax.f32 %v1692, 0.0
    %v1709 = vmax.f32 %v1693, 0.0
    %v1710 = vmax.f32 %v1694, 0.0
    %v1711 = vmax.f32 %v1695, 0.0
    %v1712 = vmax.f32 %v1696, 0.0
    %v1713 = vmax.f32 %v1697, 0.0
    %v1714 = vmax.f32 %v1698, 0.0
    %v1715 = vmax.f32 %v1699, 0.0
    %v1716 = vmax.f32 %v1700, 0.0
    %v1717 = vmax.f32 %v1701, 0.0
    %v1718 = vmax.f32 %v1702, 0.0
    %v1719 = vmax.f32 %v1703, 0.0
    %v1720 = vmax.f32 %v1704, 0.0
    %v1721 = vmax.f32 %v1705, 0.0
    %1722 = vxpose.xlu0.b32.start [1/16] %v1706, 128
    %1723 = vxpose.xlu0.b32.cont [2/16] %v1707, 128
    %1724 = vxpose.xlu0.b32.cont [3/16] %v1708, 128
    %1725 = vxpose.xlu0.b32.cont [4/16] %v1709, 128
    %1726 = vxpose.xlu0.b32.cont [5/16] %v1710, 128
    %1727 = vxpose.xlu0.b32.cont [6/16] %v1711, 128
    %1728 = vxpose.xlu0.b32.cont [7/16] %v1712, 128
    %1729 = vxpose.xlu0.b32.cont [8/16] %v1713, 128
    %1730 = vxpose.xlu0.b32.cont [9/16] 0.0, 128
    %1731 = vxpose.xlu0.b32.cont [10/16] 0.0, 128
    %1732 = vxpose.xlu0.b32.cont [11/16] 0.0, 128
    %1733 = vxpose.xlu0.b32.cont [12/16] 0.0, 128
    %1734 = vxpose.xlu0.b32.cont [13/16] 0.0, 128
    %1735 = vxpose.xlu0.b32.cont [14/16] 0.0, 128
    %1736 = vxpose.xlu0.b32.cont [15/16] 0.0, 128
    %1737 = vxpose.xlu0.b32.end [16/16] 0.0, 128
    %v1738 = vpop.trf.xlu0
    %v1739 = vpop.trf.xlu0
    %v1740 = vpop.trf.xlu0
    %v1741 = vpop.trf.xlu0
    %v1742 = vpop.trf.xlu0
    %v1743 = vpop.trf.xlu0
    %v1744 = vpop.trf.xlu0
    %v1745 = vpop.trf.xlu0
    %v1746 = vpop.trf.xlu0
    %v1747 = vpop.trf.xlu0
    %v1748 = vpop.trf.xlu0
    %v1749 = vpop.trf.xlu0
    %v1750 = vpop.trf.xlu0
    %v1751 = vpop.trf.xlu0
    %v1752 = vpop.trf.xlu0
    %v1753 = vpop.trf.xlu0
    %1754 = vxpose.xlu0.b32.start [1/16] %v1714, 128
    %1755 = vxpose.xlu0.b32.cont [2/16] %v1715, 128
    %1756 = vxpose.xlu0.b32.cont [3/16] %v1716, 128
    %1757 = vxpose.xlu0.b32.cont [4/16] %v1717, 128
    %1758 = vxpose.xlu0.b32.cont [5/16] %v1718, 128
    %1759 = vxpose.xlu0.b32.cont [6/16] %v1719, 128
    %1760 = vxpose.xlu0.b32.cont [7/16] %v1720, 128
    %1761 = vxpose.xlu0.b32.cont [8/16] %v1721, 128
    %1762 = vxpose.xlu0.b32.cont [9/16] 0.0, 128
    %1763 = vxpose.xlu0.b32.cont [10/16] 0.0, 128
    %1764 = vxpose.xlu0.b32.cont [11/16] 0.0, 128
    %1765 = vxpose.xlu0.b32.cont [12/16] 0.0, 128
    %1766 = vxpose.xlu0.b32.cont [13/16] 0.0, 128
    %1767 = vxpose.xlu0.b32.cont [14/16] 0.0, 128
    %1768 = vxpose.xlu0.b32.cont [15/16] 0.0, 128
    %1769 = vxpose.xlu0.b32.end [16/16] 0.0, 128
    %v1770 = vpop.trf.xlu0
    %v1771 = vpop.trf.xlu0
    %v1772 = vpop.trf.xlu0
    %v1773 = vpop.trf.xlu0
    %v1774 = vpop.trf.xlu0
    %v1775 = vpop.trf.xlu0
    %v1776 = vpop.trf.xlu0
    %v1777 = vpop.trf.xlu0
    %v1778 = vpop.trf.xlu0
    %v1779 = vpop.trf.xlu0
    %v1780 = vpop.trf.xlu0
    %v1781 = vpop.trf.xlu0
    %v1782 = vpop.trf.xlu0
    %v1783 = vpop.trf.xlu0
    %v1784 = vpop.trf.xlu0
    %v1785 = vpop.trf.xlu0
    %1786 = vst.msk [vmem:[#allocation2] sm:$0xff] %vm1084, %v1738
    %1787 = vst.msk [vmem:[#allocation2 + $0x8] sm:$0xff] %vm1084, %v1739
    %1788 = vst.msk [vmem:[#allocation2 + $0x10] sm:$0xff] %vm1084, %v1740
    %1789 = vst.msk [vmem:[#allocation2 + $0x18] sm:$0xff] %vm1084, %v1741
    %1790 = vst.msk [vmem:[#allocation2 + $0x20] sm:$0xff] %vm1084, %v1770
    %1791 = vst.msk [vmem:[#allocation2 + $0x28] sm:$0xff] %vm1084, %v1771
    %1792 = vst.msk [vmem:[#allocation2 + $0x30] sm:$0xff] %vm1084, %v1772
    %1793 = vst.msk [vmem:[#allocation2 + $0x38] sm:$0xff] %vm1084, %v1773
    // Predicated region
    $region38: #{tpu_custom_call.1} parent=1 // pred_check
      _
    $region39: #{tpu_custom_call.1} parent=1 // pred_check_branch
      %1795 = sbr.rel (0) target = $region41
    $region40: #{tpu_custom_call.1} parent=1 // pred_region
      %s1797 = ssub.s32 1024, 1024
      %1798 = vsyncadd [#allocation3], %s1797
      %s1799 = sshll.u32 [#allocation2], 4
      %s1800 = int_to_ptr.vmem [resolvable:$true] %s1799
      %1805 = dma.vmem_to_hbm [thread:$0]  %s1800, 1024, %s9, [#allocation3], 128, 128, 8
    $region41: #{tpu_custom_call.1} parent=1 // pred_fallthru
      _
    // Predicated region
    $region42: #{tpu_custom_call.1} parent=1 // pred_check
      _
    $region43: #{tpu_custom_call.1} parent=1 // pred_check_branch
      %1807 = sbr.rel (0) target = $region45
    $region44: #{tpu_custom_call.1} parent=1 // pred_region
      %1808 = dma.done [#allocation3], 1024
    $region45: #{tpu_custom_call.1} parent=1 // pred_fallthru
      _
    %1809 = vsyncpa [#allocation3], 1

</llo_original>
